<compile_context>
chip_gen: v7x
topology: tpu7x:2x2x1
jax: 0.10.0
libtpu: 0.0.40
codegen_flags: <defaults>
</compile_context>

<pallas_src>
import functools

import jax
import jax.numpy as jnp
from jax.experimental import pallas as pl
from jax.experimental.pallas import tpu as pltpu


_VMEM_LIMIT_BYTES = 48 * 1024 * 1024          # safe on v5e/v6e (128 MiB) and v7x (64 MiB)
_CONTRACT_LAST = (((1,), (1,)), ((), ()))     # contract last dim of both operands


def _pca_intervention_kernel(base_ref, source_ref, comp_ref, mean_ref, std_ref,
                             inv_std_ref, out_ref, *, interchange_dim, rs_cols):
    mean = mean_ref[...]          # (1, D) f32
    std = std_ref[...]            # (1, D) f32
    inv_std = inv_std_ref[...]    # (1, D) f32
    comp = comp_ref[...]          # (K, D) bf16

    # Normalize in f32 (bf16 - f32 promotes to f32), feed the MXU bf16.
    base_norm = ((base_ref[...] - mean) * inv_std).astype(comp.dtype)      # (t, D)
    source_norm = ((source_ref[...] - mean) * inv_std).astype(comp.dtype)  # (t, D)

    # Rotate into PCA space: contract the lane axes of both operands directly
    # (no comp.T / XLU transpose), f32 MXU accumulation.
    rb = jax.lax.dot_general(base_norm, comp, _CONTRACT_LAST,
                             preferred_element_type=jnp.float32)           # (t, K)
    # Only the first rs_cols source coordinates are ever used.
    rs = jax.lax.dot_general(source_norm, comp[:rs_cols, :], _CONTRACT_LAST,
                             preferred_element_type=jnp.float32)           # (t, rs_cols)

    # Interchange intervention: first `interchange_dim` PCA coords from source.
    col = jax.lax.broadcasted_iota(jnp.int32, rs.shape, dimension=1)
    head = jnp.where(col < interchange_dim, rs, rb[:, :rs_cols])
    if rs_cols == comp.shape[0]:
        mixed = head
    else:
        mixed = jnp.concatenate([head, rb[:, rs_cols:]], axis=-1)          # (t, K)

    # Rotate back (natural (t,K)x(K,D), no transpose) and de-normalize in f32.
    out = jnp.dot(mixed.astype(comp.dtype), comp,
                  preferred_element_type=jnp.float32)                      # (t, D)
    out_ref[...] = (out * std + mean).astype(out_ref.dtype)


def _invariant_spec(block_shape, single_buffer):
    """BlockSpec for a grid-invariant operand; single-buffer it if supported."""
    index_map = lambda i: (0,) * len(block_shape)
    if single_buffer:
        try:
            return pl.BlockSpec(block_shape, index_map,
                                pipeline_mode=pl.Buffered(buffer_count=1))
        except Exception:  # pipeline_mode / Buffered unavailable -> default.
            pass
    return pl.BlockSpec(block_shape, index_map)


def _choose_tile_rows(batch, embed_dim, n_components, vmem_budget_bytes):
    """Largest row tile (multiple of 8, <= 512) whose pipeline fits the budget."""
    # Double-buffered pipeline bytes per row: base + source (bf16) + out (f32).
    per_row = 2 * (2 * embed_dim * 2) + 2 * embed_dim * 4
    # Grid-invariant residents (budgeted at 2 buffers in case single-buffering
    # is unavailable) + mean/std/inv_std.
    fixed = 2 * n_components * embed_dim * 2 + 2 * 3 * embed_dim * 4
    avail = int(0.75 * vmem_budget_bytes) - fixed
    tile = max(8, min(512, batch, (avail // per_row) // 8 * 8))
    # Keep >= 2 grid steps when possible so v7x shards rows over both TCs.
    if batch // tile < 2 and batch >= 16:
        tile = max(8, (batch // 2) // 8 * 8)
    while batch % tile:
        tile -= 8
    return tile


def pca_rotated_space_intervention(base, source, components, mean, std,
                                   interchange_dim, *, tile_rows=None):
    """base/source: (B, D); components: (K, D); mean/std: (D,). Returns (B, D) f32."""
    B, D = base.shape
    K, Dc = components.shape
    assert Dc == D and source.shape == (B, D)
    assert 1 <= interchange_dim <= K
    assert B % 8 == 0, "row count must be a multiple of 8"

    if tile_rows is None:
        tile_rows = _choose_tile_rows(B, D, K, _VMEM_LIMIT_BYTES)
    assert B % tile_rows == 0

    # Only the first interchange_dim columns of the source rotation are used.
    rs_cols = min(K, max(8, -(-interchange_dim // 128) * 128))

    # bf16 for HBM traffic / MXU inputs; f32 (de)normalization parameters.
    base16 = base.astype(jnp.bfloat16)
    source16 = source.astype(jnp.bfloat16)
    comp16 = components.astype(jnp.bfloat16)
    mean2 = mean.reshape(1, D).astype(jnp.float32)
    std2 = std.reshape(1, D).astype(jnp.float32)
    inv_std2 = (1.0 / std2).astype(jnp.float32)

    kernel = functools.partial(_pca_intervention_kernel,
                               interchange_dim=interchange_dim,
                               rs_cols=rs_cols)
    row_map = lambda i: (i, 0)

    def run(single_buffer):
        grid_spec = pltpu.PrefetchScalarGridSpec(
            num_scalar_prefetch=0,
            grid=(B // tile_rows,),
            in_specs=[
                pl.BlockSpec((tile_rows, D), row_map),        # base
                pl.BlockSpec((tile_rows, D), row_map),        # source
                _invariant_spec((K, D), single_buffer),       # components
                _invariant_spec((1, D), single_buffer),       # mean
                _invariant_spec((1, D), single_buffer),       # std
                _invariant_spec((1, D), single_buffer),       # 1/std
            ],
            out_specs=pl.BlockSpec((tile_rows, D), row_map),
        )
        fn = pl.pallas_call(
            kernel,
            out_shape=jax.ShapeDtypeStruct((B, D), jnp.float32),
            grid_spec=grid_spec,
            compiler_params=pltpu.CompilerParams(
                dimension_semantics=("parallel",),
                vmem_limit_bytes=_VMEM_LIMIT_BYTES,
            ),
        )
        return jax.block_until_ready(
            fn(base16, source16, comp16, mean2, std2, inv_std2))

    try:
        return run(single_buffer=True)
    except Exception:
        # Fall back to default (double) buffering if Buffered(1) is rejected.
        return run(single_buffer=False)


def _reference_f32(base, source, components, mean, std, interchange_dim):
    inv = 1.0 / std
    base_norm = (base - mean) * inv
    source_norm = (source - mean) * inv
    rb = base_norm @ components.T
    rs = source_norm @ components.T
    rb = rb.at[:, :interchange_dim].set(rs[:, :interchange_dim])
    return (rb @ components) * std + mean


def _reference_bf16(base, source, components, mean, std, interchange_dim):
    # Emulates the kernel's numerics: bf16 MXU inputs, f32 accumulation.
    inv = (1.0 / std).astype(jnp.float32)
    comp16 = components.astype(jnp.bfloat16)
    base_norm = ((base.astype(jnp.bfloat16) - mean) * inv).astype(jnp.bfloat16)
    source_norm = ((source.astype(jnp.bfloat16) - mean) * inv).astype(jnp.bfloat16)
    rb = jax.lax.dot_general(base_norm, comp16, _CONTRACT_LAST,
                             preferred_element_type=jnp.float32)
    rs = jax.lax.dot_general(source_norm, comp16, _CONTRACT_LAST,
                             preferred_element_type=jnp.float32)
    rb = rb.at[:, :interchange_dim].set(rs[:, :interchange_dim])
    out = jnp.dot(rb.astype(jnp.bfloat16), comp16,
                  preferred_element_type=jnp.float32)
    return out * std + mean


if __name__ == "__main__":
    # Small but TPU-friendly shapes: 256 rows, embed_dim = n_components = 256
    # (lane-dense last dim), interchange over the first 10 PCA coordinates.
    B, D = 256, 256
    K = D
    interchange_dim = 10

    key = jax.random.PRNGKey(0)
    k_base, k_src, k_comp, k_mean, k_std = jax.random.split(key, 5)

    base = jax.random.normal(k_base, (B, D), dtype=jnp.float32)
    source = jax.random.normal(k_src, (B, D), dtype=jnp.float32)
    # Deterministic synthetic "PCA" parameters (not loaded from a checkpoint).
    components = jax.random.normal(k_comp, (K, D), dtype=jnp.float32) / jnp.sqrt(D)
    pca_mean = jax.random.normal(k_mean, (D,), dtype=jnp.float32)
    pca_std = jax.random.uniform(k_std, (D,), minval=0.5, maxval=1.5,
                                 dtype=jnp.float32)

    out = pca_rotated_space_intervention(base, source, components, pca_mean,
                                         pca_std, interchange_dim)
    out = jax.block_until_ready(out)

    mean2 = pca_mean.reshape(1, D)
    std2 = pca_std.reshape(1, D)
    ref16 = _reference_bf16(base, source, components, mean2, std2, interchange_dim)
    ref32 = _reference_f32(base, source, components, mean2, std2, interchange_dim)

    assert out.shape == (B, D)
    # Tight check against a reference that emulates the kernel's bf16 MXU math.
    assert jnp.allclose(out, ref16, atol=1e-3, rtol=1e-3)
    # Loose sanity check against the full-f32 reference (bf16 matmul inputs).
    rel_err = jnp.linalg.norm(out - ref32) / jnp.linalg.norm(ref32)
    assert rel_err < 3e-2

    print("KERNEL_OK")
</pallas_src>

<mosaic_0001>
module attributes {stable_mosaic.version = 11 : i64} {
  func.func @_pca_intervention_kernel(%arg0: i32, %arg1: memref<128x256xbf16, #tpu.memory_space<vmem>>, %arg2: memref<128x256xbf16, #tpu.memory_space<vmem>>, %arg3: memref<256x256xbf16, #tpu.memory_space<vmem>>, %arg4: memref<1x256xf32, #tpu.memory_space<vmem>>, %arg5: memref<1x256xf32, #tpu.memory_space<vmem>>, %arg6: memref<1x256xf32, #tpu.memory_space<vmem>>, %arg7: memref<128x256xf32, #tpu.memory_space<vmem>>) attributes {dimension_semantics = [#tpu.dimension_semantics<parallel>], iteration_bounds = array<i64: 2>, scalar_prefetch = 0 : i64, scratch_operands = 0 : i64, tpu.core_type = #tpu.core_type<tc>, window_params = [{transform_indices = @transform_0, window_bounds = array<i64: 128, 256>}, {transform_indices = @transform_1, window_bounds = array<i64: 128, 256>}, {pipeline_mode = #tpu.pipeline_mode<synchronous>, transform_indices = @transform_2, window_bounds = array<i64: 256, 256>}, {pipeline_mode = #tpu.pipeline_mode<synchronous>, transform_indices = @transform_3, window_bounds = array<i64: 1, 256>}, {pipeline_mode = #tpu.pipeline_mode<synchronous>, transform_indices = @transform_4, window_bounds = array<i64: 1, 256>}, {pipeline_mode = #tpu.pipeline_mode<synchronous>, transform_indices = @transform_5, window_bounds = array<i64: 1, 256>}, {transform_indices = @transform_6, window_bounds = array<i64: 128, 256>}]} {
    %c0 = arith.constant 0 : index
    %c0_0 = arith.constant 0 : index
    %0 = vector.load %arg4[%c0, %c0_0] : memref<1x256xf32, #tpu.memory_space<vmem>>, vector<1x256xf32>
    %c0_1 = arith.constant 0 : index
    %c0_2 = arith.constant 0 : index
    %1 = vector.load %arg5[%c0_1, %c0_2] : memref<1x256xf32, #tpu.memory_space<vmem>>, vector<1x256xf32>
    %c0_3 = arith.constant 0 : index
    %c0_4 = arith.constant 0 : index
    %2 = vector.load %arg6[%c0_3, %c0_4] : memref<1x256xf32, #tpu.memory_space<vmem>>, vector<1x256xf32>
    %c0_5 = arith.constant 0 : index
    %c0_6 = arith.constant 0 : index
    %3 = vector.load %arg3[%c0_5, %c0_6] : memref<256x256xbf16, #tpu.memory_space<vmem>>, vector<256x256xbf16>
    %c0_7 = arith.constant 0 : index
    %c0_8 = arith.constant 0 : index
    %4 = vector.load %arg1[%c0_7, %c0_8] : memref<128x256xbf16, #tpu.memory_space<vmem>>, vector<128x256xbf16>
    %5 = arith.extf %4 : vector<128x256xbf16> to vector<128x256xf32>
    %6 = vector.broadcast %0 : vector<1x256xf32> to vector<128x256xf32>
    %7 = arith.subf %5, %6 : vector<128x256xf32>
    %8 = vector.broadcast %2 : vector<1x256xf32> to vector<128x256xf32>
    %9 = arith.mulf %7, %8 : vector<128x256xf32>
    %10 = arith.truncf %9 : vector<128x256xf32> to vector<128x256xbf16>
    %c0_9 = arith.constant 0 : index
    %c0_10 = arith.constant 0 : index
    %11 = vector.load %arg2[%c0_9, %c0_10] : memref<128x256xbf16, #tpu.memory_space<vmem>>, vector<128x256xbf16>
    %12 = arith.extf %11 : vector<128x256xbf16> to vector<128x256xf32>
    %13 = vector.broadcast %0 : vector<1x256xf32> to vector<128x256xf32>
    %14 = arith.subf %12, %13 : vector<128x256xf32>
    %15 = vector.broadcast %2 : vector<1x256xf32> to vector<128x256xf32>
    %16 = arith.mulf %14, %15 : vector<128x256xf32>
    %17 = arith.truncf %16 : vector<128x256xf32> to vector<128x256xbf16>
    %cst = arith.constant dense<0.000000e+00> : vector<128x256xf32>
    %18 = tpu.matmul %10, %3, %cst {dimension_numbers = #tpu.dot_dimension_numbers<[1], [1], [0], [0], [0, 0, 1, 0], [], []>} : vector<128x256xbf16>, vector<256x256xbf16>, vector<128x256xf32> -> vector<128x256xf32>
    %19 = vector.extract_strided_slice %3 {offsets = [0, 0], sizes = [128, 256], strides = [1, 1]} : vector<256x256xbf16> to vector<128x256xbf16>
    %cst_11 = arith.constant dense<0.000000e+00> : vector<128x128xf32>
    %20 = tpu.matmul %17, %19, %cst_11 {dimension_numbers = #tpu.dot_dimension_numbers<[1], [1], [0], [0], [0, 0, 1, 0], [], []>} : vector<128x256xbf16>, vector<128x256xbf16>, vector<128x128xf32> -> vector<128x128xf32>
    %21 = tpu.iota {dimensions = array<i32: 1>} : vector<128x128xi32>
    %c10_i32 = arith.constant 10 : i32
    %22 = vector.broadcast %c10_i32 : i32 to vector<128x128xi32>
    %23 = arith.cmpi slt, %21, %22 : vector<128x128xi32>
    %24 = vector.extract_strided_slice %18 {offsets = [0, 0], sizes = [128, 128], strides = [1, 1]} : vector<128x256xf32> to vector<128x128xf32>
    %25 = arith.select %23, %20, %24 : vector<128x128xi1>, vector<128x128xf32>
    %26 = vector.extract_strided_slice %18 {offsets = [0, 128], sizes = [128, 128], strides = [1, 1]} : vector<128x256xf32> to vector<128x128xf32>
    %27 = tpu.concatenate %25, %26 in 1 : vector<128x128xf32>, vector<128x128xf32> -> vector<128x256xf32>
    %28 = arith.truncf %27 : vector<128x256xf32> to vector<128x256xbf16>
    %cst_12 = arith.constant dense<0.000000e+00> : vector<128x256xf32>
    %29 = tpu.matmul %28, %3, %cst_12 {dimension_numbers = #tpu.dot_dimension_numbers<[1], [0], [0], [1], [0, 0, 1, 1], [], []>} : vector<128x256xbf16>, vector<256x256xbf16>, vector<128x256xf32> -> vector<128x256xf32>
    %30 = vector.broadcast %1 : vector<1x256xf32> to vector<128x256xf32>
    %31 = arith.mulf %29, %30 : vector<128x256xf32>
    %32 = vector.broadcast %0 : vector<1x256xf32> to vector<128x256xf32>
    %33 = arith.addf %31, %32 : vector<128x256xf32>
    %c0_13 = arith.constant 0 : index
    %c0_14 = arith.constant 0 : index
    %34 = vector.load %arg7[%c0_13, %c0_14] : memref<128x256xf32, #tpu.memory_space<vmem>>, vector<128x256xf32>
    tpu.vector_store %arg7[%c0_13, %c0_14], %33 {strides = array<i32>} : memref<128x256xf32, #tpu.memory_space<vmem>>, vector<128x256xf32>,
    return
  }
  func.func @transform_0(%arg0: i32) -> (i32, i32) {
    %c0_i32 = arith.constant 0 : i32
    %c0_i32_0 = arith.constant 0 : i32
    return %arg0, %c0_i32 : i32, i32
  }
  func.func @transform_1(%arg0: i32) -> (i32, i32) {
    %c0_i32 = arith.constant 0 : i32
    %c0_i32_0 = arith.constant 0 : i32
    return %arg0, %c0_i32 : i32, i32
  }
  func.func @transform_2(%arg0: i32) -> (i32, i32) {
    %c0_i32 = arith.constant 0 : i32
    %c0_i32_0 = arith.constant 0 : i32
    %c0_i32_1 = arith.constant 0 : i32
    return %c0_i32, %c0_i32_0 : i32, i32
  }
  func.func @transform_3(%arg0: i32) -> (i32, i32) {
    %c0_i32 = arith.constant 0 : i32
    %c0_i32_0 = arith.constant 0 : i32
    %c0_i32_1 = arith.constant 0 : i32
    return %c0_i32, %c0_i32_0 : i32, i32
  }
  func.func @transform_4(%arg0: i32) -> (i32, i32) {
    %c0_i32 = arith.constant 0 : i32
    %c0_i32_0 = arith.constant 0 : i32
    %c0_i32_1 = arith.constant 0 : i32
    return %c0_i32, %c0_i32_0 : i32, i32
  }
  func.func @transform_5(%arg0: i32) -> (i32, i32) {
    %c0_i32 = arith.constant 0 : i32
    %c0_i32_0 = arith.constant 0 : i32
    %c0_i32_1 = arith.constant 0 : i32
    return %c0_i32, %c0_i32_0 : i32, i32
  }
  func.func @transform_6(%arg0: i32) -> (i32, i32) {
    %c0_i32 = arith.constant 0 : i32
    %c0_i32_0 = arith.constant 0 : i32
    return %arg0, %c0_i32 : i32, i32
  }
}

module attributes {stable_mosaic.version = 11 : i64} {
  func.func @_pca_intervention_kernel(%arg0: i32, %arg1: memref<128x256xbf16, #tpu.memory_space<vmem>>, %arg2: memref<128x256xbf16, #tpu.memory_space<vmem>>, %arg3: memref<256x256xbf16, #tpu.memory_space<vmem>>, %arg4: memref<1x256xf32, #tpu.memory_space<vmem>>, %arg5: memref<1x256xf32, #tpu.memory_space<vmem>>, %arg6: memref<1x256xf32, #tpu.memory_space<vmem>>, %arg7: memref<128x256xf32, #tpu.memory_space<vmem>>) attributes {dimension_semantics = [#tpu.dimension_semantics<parallel>], iteration_bounds = array<i64: 2>, scalar_prefetch = 0 : i64, scratch_operands = 0 : i64, tpu.core_type = #tpu.core_type<tc>, window_params = [{transform_indices = @transform_0, window_bounds = array<i64: 128, 256>}, {transform_indices = @transform_1, window_bounds = array<i64: 128, 256>}, {pipeline_mode = #tpu.pipeline_mode<synchronous>, transform_indices = @transform_2, window_bounds = array<i64: 256, 256>}, {pipeline_mode = #tpu.pipeline_mode<synchronous>, transform_indices = @transform_3, window_bounds = array<i64: 1, 256>}, {pipeline_mode = #tpu.pipeline_mode<synchronous>, transform_indices = @transform_4, window_bounds = array<i64: 1, 256>}, {pipeline_mode = #tpu.pipeline_mode<synchronous>, transform_indices = @transform_5, window_bounds = array<i64: 1, 256>}, {transform_indices = @transform_6, window_bounds = array<i64: 128, 256>}]} {
    %c0 = arith.constant 0 : index
    %c0_0 = arith.constant 0 : index
    %0 = vector.load %arg4[%c0, %c0_0] : memref<1x256xf32, #tpu.memory_space<vmem>>, vector<1x256xf32>
    %c0_1 = arith.constant 0 : index
    %c0_2 = arith.constant 0 : index
    %1 = vector.load %arg5[%c0_1, %c0_2] : memref<1x256xf32, #tpu.memory_space<vmem>>, vector<1x256xf32>
    %c0_3 = arith.constant 0 : index
    %c0_4 = arith.constant 0 : index
    %2 = vector.load %arg6[%c0_3, %c0_4] : memref<1x256xf32, #tpu.memory_space<vmem>>, vector<1x256xf32>
    %c0_5 = arith.constant 0 : index
    %c0_6 = arith.constant 0 : index
    %3 = vector.load %arg3[%c0_5, %c0_6] : memref<256x256xbf16, #tpu.memory_space<vmem>>, vector<256x256xbf16>
    %c0_7 = arith.constant 0 : index
    %c0_8 = arith.constant 0 : index
    %4 = vector.load %arg1[%c0_7, %c0_8] : memref<128x256xbf16, #tpu.memory_space<vmem>>, vector<128x256xbf16>
    %5 = arith.extf %4 : vector<128x256xbf16> to vector<128x256xf32>
    %6 = vector.broadcast %0 : vector<1x256xf32> to vector<128x256xf32>
    %7 = arith.subf %5, %6 : vector<128x256xf32>
    %8 = vector.broadcast %2 : vector<1x256xf32> to vector<128x256xf32>
    %9 = arith.mulf %7, %8 : vector<128x256xf32>
    %10 = arith.truncf %9 : vector<128x256xf32> to vector<128x256xbf16>
    %c0_9 = arith.constant 0 : index
    %c0_10 = arith.constant 0 : index
    %11 = vector.load %arg2[%c0_9, %c0_10] : memref<128x256xbf16, #tpu.memory_space<vmem>>, vector<128x256xbf16>
    %12 = arith.extf %11 : vector<128x256xbf16> to vector<128x256xf32>
    %13 = vector.broadcast %0 : vector<1x256xf32> to vector<128x256xf32>
    %14 = arith.subf %12, %13 : vector<128x256xf32>
    %15 = vector.broadcast %2 : vector<1x256xf32> to vector<128x256xf32>
    %16 = arith.mulf %14, %15 : vector<128x256xf32>
    %17 = arith.truncf %16 : vector<128x256xf32> to vector<128x256xbf16>
    %cst = arith.constant dense<0.000000e+00> : vector<128x256xf32>
    %18 = tpu.matmul %10, %3, %cst {dimension_numbers = #tpu.dot_dimension_numbers<[1], [1], [0], [0], [0, 0, 1, 0], [], []>} : vector<128x256xbf16>, vector<256x256xbf16>, vector<128x256xf32> -> vector<128x256xf32>
    %19 = vector.extract_strided_slice %3 {offsets = [0, 0], sizes = [128, 256], strides = [1, 1]} : vector<256x256xbf16> to vector<128x256xbf16>
    %cst_11 = arith.constant dense<0.000000e+00> : vector<128x128xf32>
    %20 = tpu.matmul %17, %19, %cst_11 {dimension_numbers = #tpu.dot_dimension_numbers<[1], [1], [0], [0], [0, 0, 1, 0], [], []>} : vector<128x256xbf16>, vector<128x256xbf16>, vector<128x128xf32> -> vector<128x128xf32>
    %21 = tpu.iota {dimensions = array<i32: 1>} : vector<128x128xi32>
    %c10_i32 = arith.constant 10 : i32
    %22 = vector.broadcast %c10_i32 : i32 to vector<128x128xi32>
    %23 = arith.cmpi slt, %21, %22 : vector<128x128xi32>
    %24 = vector.extract_strided_slice %18 {offsets = [0, 0], sizes = [128, 128], strides = [1, 1]} : vector<128x256xf32> to vector<128x128xf32>
    %25 = arith.select %23, %20, %24 : vector<128x128xi1>, vector<128x128xf32>
    %26 = vector.extract_strided_slice %18 {offsets = [0, 128], sizes = [128, 128], strides = [1, 1]} : vector<128x256xf32> to vector<128x128xf32>
    %27 = tpu.concatenate %25, %26 in 1 : vector<128x128xf32>, vector<128x128xf32> -> vector<128x256xf32>
    %28 = arith.truncf %27 : vector<128x256xf32> to vector<128x256xbf16>
    %cst_12 = arith.constant dense<0.000000e+00> : vector<128x256xf32>
    %29 = tpu.matmul %28, %3, %cst_12 {dimension_numbers = #tpu.dot_dimension_numbers<[1], [0], [0], [1], [0, 0, 1, 1], [], []>} : vector<128x256xbf16>, vector<256x256xbf16>, vector<128x256xf32> -> vector<128x256xf32>
    %30 = vector.broadcast %1 : vector<1x256xf32> to vector<128x256xf32>
    %31 = arith.mulf %29, %30 : vector<128x256xf32>
    %32 = vector.broadcast %0 : vector<1x256xf32> to vector<128x256xf32>
    %33 = arith.addf %31, %32 : vector<128x256xf32>
    %c0_13 = arith.constant 0 : index
    %c0_14 = arith.constant 0 : index
    %34 = vector.load %arg7[%c0_13, %c0_14] : memref<128x256xf32, #tpu.memory_space<vmem>>, vector<128x256xf32>
    tpu.vector_store %arg7[%c0_13, %c0_14], %33 {strides = array<i32>} : memref<128x256xf32, #tpu.memory_space<vmem>>, vector<128x256xf32>,
    return
  }
  func.func @transform_0(%arg0: i32) -> (i32, i32) {
    %c0_i32 = arith.constant 0 : i32
    %c0_i32_0 = arith.constant 0 : i32
    return %arg0, %c0_i32 : i32, i32
  }
  func.func @transform_1(%arg0: i32) -> (i32, i32) {
    %c0_i32 = arith.constant 0 : i32
    %c0_i32_0 = arith.constant 0 : i32
    return %arg0, %c0_i32 : i32, i32
  }
  func.func @transform_2(%arg0: i32) -> (i32, i32) {
    %c0_i32 = arith.constant 0 : i32
    %c0_i32_0 = arith.constant 0 : i32
    %c0_i32_1 = arith.constant 0 : i32
    return %c0_i32, %c0_i32_0 : i32, i32
  }
  func.func @transform_3(%arg0: i32) -> (i32, i32) {
    %c0_i32 = arith.constant 0 : i32
    %c0_i32_0 = arith.constant 0 : i32
    %c0_i32_1 = arith.constant 0 : i32
    return %c0_i32, %c0_i32_0 : i32, i32
  }
  func.func @transform_4(%arg0: i32) -> (i32, i32) {
    %c0_i32 = arith.constant 0 : i32
    %c0_i32_0 = arith.constant 0 : i32
    %c0_i32_1 = arith.constant 0 : i32
    return %c0_i32, %c0_i32_0 : i32, i32
  }
  func.func @transform_5(%arg0: i32) -> (i32, i32) {
    %c0_i32 = arith.constant 0 : i32
    %c0_i32_0 = arith.constant 0 : i32
    %c0_i32_1 = arith.constant 0 : i32
    return %c0_i32, %c0_i32_0 : i32, i32
  }
  func.func @transform_6(%arg0: i32) -> (i32, i32) {
    %c0_i32 = arith.constant 0 : i32
    %c0_i32_0 = arith.constant 0 : i32
    return %arg0, %c0_i32 : i32, i32
  }
}

</mosaic_0001>

<llo_original>
// kernel: tpu_custom_call.1
$region0: #{tpu_custom_call.1}
  #allocation0 [shape = 'u32[]', space=smem, size = 0x4, offset = 0x4, fixed_abs, tag = 'smem constant byte address 0x4 - core index']
  #allocation1 [shape = 'u32[144,128]{1,0:T(1,128)}', space=vmem, size = 0x12000, scoped, tag = 'internal scratch']
  %s0 = inlined_call_operand.hbm [shape: bf16[256,256], index: 0, kind: input, shape index: {}]
  %s1 = inlined_call_operand.hbm [shape: bf16[256,256], index: 1, kind: input, shape index: {}]
  %s2 = inlined_call_operand.hbm [shape: bf16[256,256], index: 2, kind: input, shape index: {}]
  %s3 = inlined_call_operand.vmem [shape: f32[1,256], index: 3, kind: input, shape index: {}]
  %s4 = inlined_call_operand.vmem [shape: f32[1,256], index: 4, kind: input, shape index: {}]
  %s5 = inlined_call_operand.vmem [shape: f32[1,256], index: 5, kind: input, shape index: {}]
  %s6 = inlined_call_operand.hbm [shape: f32[256,256], index: 6, kind: output, shape index: {}]
  %s7 = sld [smem:[#allocation0]]
  $region69: #{tpu_custom_call.1} parent=0
    _
  %s9 = ssub.s32 1, %s7
  %s10 = scalar_select 0, %s9, %s7
  $region1: #{tpu_custom_call.1} parent=0
    #allocation2 [shape = 'u8[131072]{0}', space=vmem, size = 0x20000, scoped, tag = 'input window, operand 0']
    #allocation3 [shape = 's32[2]{0}', space=sflag, size = 0x8, scoped, tag = 'scoped memory for tpu_custom_call.1']
    #allocation4 [shape = 's32[2]{0}', space=sflag, size = 0x8, scoped, tag = 'scoped memory for tpu_custom_call.1']
    #allocation5 [shape = 'u8[131072]{0}', space=vmem, size = 0x20000, scoped, tag = 'input window, operand 1']
    #allocation6 [shape = 's32[2]{0}', space=sflag, size = 0x8, scoped, tag = 'scoped memory for tpu_custom_call.1']
    #allocation7 [shape = 'u8[131072]{0}', space=vmem, size = 0x20000, scoped, tag = 'input window, operand 2, single buffered']
    #allocation8 [shape = 'u8[262144]{0}', space=vmem, size = 0x40000, scoped, tag = 'output window, operand 0']
    %11 = vsyncpa [#allocation3], 0
    %s12 = scalar_lea.sflag [#allocation3], 1
    %13 = vsyncpa %s12, 0
    %14 = vsyncpa [#allocation6], 0
    %s15 = scalar_lea.sflag [#allocation6], 1
    %16 = vsyncpa %s15, 0
    %17 = vsyncpa [#allocation4], 0
    %s18 = scalar_lea.sflag [#allocation4], 1
    %19 = vsyncpa %s18, 0
    loop: start=0, step=1, limit=4
    $region2: #{tpu_custom_call.1} parent=1 // loop_pre_header
      _
    $region3: #{tpu_custom_call.1} parent=1 // loop_header
      %s21 = sphi 0, %s25
      %p22 = scmp.ge.s32.totalorder %s21, 4
      %s31 = sphi 0, %s33
      %s34 = sphi 0, %s31
      %s35 = sphi 0, %s34
      %s51 = sphi 0, %s35
      %s57 = sphi 0, %s59
      %s60 = sphi 0, %s57
      %s61 = sphi 0, %s60
      %s77 = sphi 0, %s61
      %s81 = sphi 0, %s81
      %s83 = sphi 0, %s81
      %s84 = sphi 0, %s83
      %s98 = sphi 0, %s84
      %s102 = sphi 0, %s102
      %s104 = sphi 0, %s102
      %s105 = sphi 0, %s104
      %s119 = sphi 0, %s105
      %s123 = sphi 0, %s123
      %s125 = sphi 0, %s123
      %s126 = sphi 0, %s125
      %s140 = sphi 0, %s126
      %s144 = sphi 0, %s144
      %s146 = sphi 0, %s144
      %s147 = sphi 0, %s146
      %s161 = sphi 0, %s147
      %s167 = sphi 0, %s169
      %s170 = sphi 0, %s167
      %s171 = sphi 0, %s170
      %s187 = sphi 0, %s171
    $region4: #{tpu_custom_call.1} parent=1 // loop_header_branch
      %24 = sbr.rel (%p22) target = $region8
    $region5: #{tpu_custom_call.1} parent=1 // loop_body
      %s26 = ssub.s32 %s21, 1
      %s27 = ssub.s32 %s21, 2
      %s28 = sadd.s32 %s21, 1
      %s29 = ssub.s32 %s21, %s28
      %p30 = scmp.eq.s32.totalorder %s29, 0
      %s32 = sadd.s32 %s31, 1
      %s33 = scalar_select %p30, %s31, %s32
      %p36 = pneg %p30
      %p37 = scmp.eq.s32.totalorder %s21, 1
      %p38 = por %p36, %p37
      %p39 = scmp.ne.s32.totalorder %s31, %s34
      %p40 = scmp.eq.s32.totalorder %s21, 0
      %p41 = por %p39, %p40
      %p42 = scmp.ne.s32.totalorder %s31, %s34
      %p43 = scmp.eq.s32.totalorder %s26, 1
      %p44 = por %p42, %p43
      %p45 = scmp.ne.s32.totalorder %s34, %s35
      %p46 = scmp.eq.s32.totalorder %s26, 0
      %p47 = por %p45, %p46
      %p48 = scmp.ne.s32.totalorder %s34, %s35
      %p49 = scmp.eq.s32.totalorder %s27, 1
      %p50 = por %p48, %p49
      %p52 = scmp.ne.s32.totalorder %s35, %s51
      %p53 = scmp.eq.s32.totalorder %s27, 0
      %p54 = por %p52, %p53
      %s55 = ssub.s32 %s21, %s28
      %p56 = scmp.eq.s32.totalorder %s55, 0
      %s58 = sadd.s32 %s57, 1
      %s59 = scalar_select %p56, %s57, %s58
      %p62 = pneg %p56
      %p63 = scmp.eq.s32.totalorder %s21, 1
      %p64 = por %p62, %p63
      %p65 = scmp.ne.s32.totalorder %s57, %s60
      %p66 = scmp.eq.s32.totalorder %s21, 0
      %p67 = por %p65, %p66
      %p68 = scmp.ne.s32.totalorder %s57, %s60
      %p69 = scmp.eq.s32.totalorder %s26, 1
      %p70 = por %p68, %p69
      %p71 = scmp.ne.s32.totalorder %s60, %s61
      %p72 = scmp.eq.s32.totalorder %s26, 0
      %p73 = por %p71, %p72
      %p74 = scmp.ne.s32.totalorder %s60, %s61
      %p75 = scmp.eq.s32.totalorder %s27, 1
      %p76 = por %p74, %p75
      %p78 = scmp.ne.s32.totalorder %s61, %s77
      %p79 = scmp.eq.s32.totalorder %s27, 0
      %p80 = por %p78, %p79
      %s82 = sadd.s32 %s81, 1
      %p85 = scmp.eq.s32.totalorder %s21, 1
      %p86 = scmp.ne.s32.totalorder %s81, %s83
      %p87 = scmp.eq.s32.totalorder %s21, 0
      %p88 = por %p86, %p87
      %p89 = scmp.ne.s32.totalorder %s81, %s83
      %p90 = scmp.eq.s32.totalorder %s26, 1
      %p91 = por %p89, %p90
      %p92 = scmp.ne.s32.totalorder %s83, %s84
      %p93 = scmp.eq.s32.totalorder %s26, 0
      %p94 = por %p92, %p93
      %p95 = scmp.ne.s32.totalorder %s83, %s84
      %p96 = scmp.eq.s32.totalorder %s27, 1
      %p97 = por %p95, %p96
      %p99 = scmp.ne.s32.totalorder %s84, %s98
      %p100 = scmp.eq.s32.totalorder %s27, 0
      %p101 = por %p99, %p100
      %s103 = sadd.s32 %s102, 1
      %p106 = scmp.eq.s32.totalorder %s21, 1
      %p107 = scmp.ne.s32.totalorder %s102, %s104
      %p108 = scmp.eq.s32.totalorder %s21, 0
      %p109 = por %p107, %p108
      %p110 = scmp.ne.s32.totalorder %s102, %s104
      %p111 = scmp.eq.s32.totalorder %s26, 1
      %p112 = por %p110, %p111
      %p113 = scmp.ne.s32.totalorder %s104, %s105
      %p114 = scmp.eq.s32.totalorder %s26, 0
      %p115 = por %p113, %p114
      %p116 = scmp.ne.s32.totalorder %s104, %s105
      %p117 = scmp.eq.s32.totalorder %s27, 1
      %p118 = por %p116, %p117
      %p120 = scmp.ne.s32.totalorder %s105, %s119
      %p121 = scmp.eq.s32.totalorder %s27, 0
      %p122 = por %p120, %p121
      %s124 = sadd.s32 %s123, 1
      %p127 = scmp.eq.s32.totalorder %s21, 1
      %p128 = scmp.ne.s32.totalorder %s123, %s125
      %p129 = scmp.eq.s32.totalorder %s21, 0
      %p130 = por %p128, %p129
      %p131 = scmp.ne.s32.totalorder %s123, %s125
      %p132 = scmp.eq.s32.totalorder %s26, 1
      %p133 = por %p131, %p132
      %p134 = scmp.ne.s32.totalorder %s125, %s126
      %p135 = scmp.eq.s32.totalorder %s26, 0
      %p136 = por %p134, %p135
      %p137 = scmp.ne.s32.totalorder %s125, %s126
      %p138 = scmp.eq.s32.totalorder %s27, 1
      %p139 = por %p137, %p138
      %p141 = scmp.ne.s32.totalorder %s126, %s140
      %p142 = scmp.eq.s32.totalorder %s27, 0
      %p143 = por %p141, %p142
      %s145 = sadd.s32 %s144, 1
      %p148 = scmp.eq.s32.totalorder %s21, 1
      %p149 = scmp.ne.s32.totalorder %s144, %s146
      %p150 = scmp.eq.s32.totalorder %s21, 0
      %p151 = por %p149, %p150
      %p152 = scmp.ne.s32.totalorder %s144, %s146
      %p153 = scmp.eq.s32.totalorder %s26, 1
      %p154 = por %p152, %p153
      %p155 = scmp.ne.s32.totalorder %s146, %s147
      %p156 = scmp.eq.s32.totalorder %s26, 0
      %p157 = por %p155, %p156
      %p158 = scmp.ne.s32.totalorder %s146, %s147
      %p159 = scmp.eq.s32.totalorder %s27, 1
      %p160 = por %p158, %p159
      %p162 = scmp.ne.s32.totalorder %s147, %s161
      %p163 = scmp.eq.s32.totalorder %s27, 0
      %p164 = por %p162, %p163
      %s165 = ssub.s32 %s21, %s28
      %p166 = scmp.eq.s32.totalorder %s165, 0
      %s168 = sadd.s32 %s167, 1
      %s169 = scalar_select %p166, %s167, %s168
      %p172 = pneg %p166
      %p173 = scmp.eq.s32.totalorder %s21, 1
      %p174 = por %p172, %p173
      %p175 = scmp.ne.s32.totalorder %s167, %s170
      %p176 = scmp.eq.s32.totalorder %s21, 0
      %p177 = por %p175, %p176
      %p178 = scmp.ne.s32.totalorder %s167, %s170
      %p179 = scmp.eq.s32.totalorder %s26, 1
      %p180 = por %p178, %p179
      %p181 = scmp.ne.s32.totalorder %s170, %s171
      %p182 = scmp.eq.s32.totalorder %s26, 0
      %p183 = por %p181, %p182
      %p184 = scmp.ne.s32.totalorder %s170, %s171
      %p185 = scmp.eq.s32.totalorder %s27, 1
      %p186 = por %p184, %p185
      %p188 = scmp.ne.s32.totalorder %s171, %s187
      %p189 = scmp.eq.s32.totalorder %s27, 0
      %p190 = por %p188, %p189
      %p191 = scmp.le.s32.totalorder 1, %s21
      %p192 = scmp.lt.s32.totalorder %s21, 3
      %p193 = pnand %p191, %p192
      %p194 = pneg %p193
      // Predicated region
      $region9: #{tpu_custom_call.1} parent=5 // pred_check
        _
      $region10: #{tpu_custom_call.1} parent=5 // pred_check_branch
        %196 = sbr.rel (%p193) target = $region12
      $region11: #{tpu_custom_call.1} parent=5 // pred_region
        %s197 = ssub.s32 %s21, 1
        // Predicated region
        $region13: #{tpu_custom_call.1} parent=11 // pred_check
          %p198 = pneg %p94
        $region14: #{tpu_custom_call.1} parent=11 // pred_check_branch
          %200 = sbr.rel (%p198) target = $region16
        $region15: #{tpu_custom_call.1} parent=11 // pred_region
          %s202 = ssub.s32 4096, 4096
          %203 = vsyncadd [#allocation6], %s202
          %s204 = sshll.u32 [#allocation7], 4
          %s205 = int_to_ptr.vmem [resolvable:$true] %s204
          %210 = dma.hbm_to_vmem [thread:$0]  %s2, 4096, %s205, [#allocation6], 128, 128, 8
        $region16: #{tpu_custom_call.1} parent=11 // pred_fallthru
          _
        // Predicated region
        $region17: #{tpu_custom_call.1} parent=11 // pred_check
          %p211 = pneg %p115
        $region18: #{tpu_custom_call.1} parent=11 // pred_check_branch
          %213 = sbr.rel (%p211) target = $region20
        $region19: #{tpu_custom_call.1} parent=11 // pred_region
          _
        $region20: #{tpu_custom_call.1} parent=11 // pred_fallthru
          _
        // Predicated region
        $region21: #{tpu_custom_call.1} parent=11 // pred_check
          %p214 = pneg %p136
        $region22: #{tpu_custom_call.1} parent=11 // pred_check_branch
          %216 = sbr.rel (%p214) target = $region24
        $region23: #{tpu_custom_call.1} parent=11 // pred_region
          _
        $region24: #{tpu_custom_call.1} parent=11 // pred_fallthru
          _
        // Predicated region
        $region25: #{tpu_custom_call.1} parent=11 // pred_check
          %p217 = pneg %p157
        $region26: #{tpu_custom_call.1} parent=11 // pred_check_branch
          %219 = sbr.rel (%p217) target = $region28
        $region27: #{tpu_custom_call.1} parent=11 // pred_region
          _
        $region28: #{tpu_custom_call.1} parent=11 // pred_fallthru
          _
      $region12: #{tpu_custom_call.1} parent=5 // pred_fallthru
        _
      %p220 = scmp.lt.s32.totalorder %s21, 2
      // Predicated region
      $region29: #{tpu_custom_call.1} parent=5 // pred_check
        %p221 = pneg %p220
      $region30: #{tpu_custom_call.1} parent=5 // pred_check_branch
        %223 = sbr.rel (%p221) target = $region32
      $region31: #{tpu_custom_call.1} parent=5 // pred_region
        // Predicated region
        $region33: #{tpu_custom_call.1} parent=31 // pred_check
          %p224 = pneg %p41
        $region34: #{tpu_custom_call.1} parent=31 // pred_check_branch
          %226 = sbr.rel (%p224) target = $region36
        $region35: #{tpu_custom_call.1} parent=31 // pred_region
          %s227 = sand.u32 %s31, 1
          %s228 = scalar_lea.sflag [#allocation3], %s227
          %s229 = sand.u32 %s31, 1
          %s230 = smul.addr %s229, 128
          %s231 = scalar_lea.vmem [#allocation2], %s230
          %s232 = smul.u32 16, %s21
          %s234 = ssub.s32 2048, 2048
          %235 = vsyncadd %s228, %s234
          %s236 = smul.addr %s232, 2
          %s237 = smul.addr %s236, 64
          %s238 = scalar_lea.hbm %s0, %s237
          %s239 = sshll.u32 %s231, 4
          %s240 = int_to_ptr.vmem [resolvable:$true] %s239
          %245 = dma.hbm_to_vmem [thread:$0]  %s238, 2048, %s240, %s228, 128, 128, 8
        $region36: #{tpu_custom_call.1} parent=31 // pred_fallthru
          _
        // Predicated region
        $region37: #{tpu_custom_call.1} parent=31 // pred_check
          %p246 = pneg %p67
        $region38: #{tpu_custom_call.1} parent=31 // pred_check_branch
          %248 = sbr.rel (%p246) target = $region40
        $region39: #{tpu_custom_call.1} parent=31 // pred_region
          %s249 = sand.u32 %s21, 1
          %s250 = scalar_lea.sflag [#allocation6], %s249
          %s251 = sand.u32 %s57, 1
          %s252 = smul.addr %s251, 128
          %s253 = scalar_lea.vmem [#allocation5], %s252
          %s254 = smul.u32 16, %s21
          %s256 = ssub.s32 2048, 2048
          %257 = vsyncadd %s250, %s256
          %s258 = smul.addr %s254, 2
          %s259 = smul.addr %s258, 64
          %s260 = scalar_lea.hbm %s1, %s259
          %s261 = sshll.u32 %s253, 4
          %s262 = int_to_ptr.vmem [resolvable:$true] %s261
          %267 = dma.hbm_to_vmem [thread:$0]  %s260, 2048, %s262, %s250, 128, 128, 8
        $region40: #{tpu_custom_call.1} parent=31 // pred_fallthru
          _
      $region32: #{tpu_custom_call.1} parent=5 // pred_fallthru
        _
      %p268 = scmp.le.s32.totalorder 1, %s21
      %p269 = scmp.lt.s32.totalorder %s21, 3
      %p270 = pnand %p268, %p269
      %p271 = pneg %p270
      // Predicated region
      $region41: #{tpu_custom_call.1} parent=5 // pred_check
        _
      $region42: #{tpu_custom_call.1} parent=5 // pred_check_branch
        %273 = sbr.rel (%p270) target = $region44
      $region43: #{tpu_custom_call.1} parent=5 // pred_region
        %s274 = ssub.s32 %s21, 1
        %s275 = sand.u32 %s34, 1
        %s276 = scalar_lea.sflag [#allocation3], %s275
        %s277 = sand.u32 %s34, 1
        %s278 = smul.addr %s277, 128
        %s279 = scalar_lea.vmem [#allocation2], %s278
        // Predicated region
        $region45: #{tpu_custom_call.1} parent=43 // pred_check
          %p280 = pneg %p47
        $region46: #{tpu_custom_call.1} parent=43 // pred_check_branch
          %282 = sbr.rel (%p280) target = $region48
        $region47: #{tpu_custom_call.1} parent=43 // pred_region
          %283 = dma.done %s276, 2048
        $region48: #{tpu_custom_call.1} parent=43 // pred_fallthru
          _
        %s284 = sand.u32 %s26, 1
        %s285 = scalar_lea.sflag [#allocation6], %s284
        %s286 = sand.u32 %s60, 1
        %s287 = smul.addr %s286, 128
        %s288 = scalar_lea.vmem [#allocation5], %s287
        // Predicated region
        $region49: #{tpu_custom_call.1} parent=43 // pred_check
          %p289 = pneg %p73
        $region50: #{tpu_custom_call.1} parent=43 // pred_check_branch
          %291 = sbr.rel (%p289) target = $region52
        $region51: #{tpu_custom_call.1} parent=43 // pred_region
          %292 = dma.done %s285, 2048
        $region52: #{tpu_custom_call.1} parent=43 // pred_fallthru
          _
        // Predicated region
        $region53: #{tpu_custom_call.1} parent=43 // pred_check
          %p293 = pneg %p94
        $region54: #{tpu_custom_call.1} parent=43 // pred_check_branch
          %295 = sbr.rel (%p293) target = $region56
        $region55: #{tpu_custom_call.1} parent=43 // pred_region
          %296 = dma.done [#allocation6], 4096
        $region56: #{tpu_custom_call.1} parent=43 // pred_fallthru
          _
        %s297 = sand.u32 %s34, 1
        %s298 = scalar_lea.sflag [#allocation3], %s297
        %s299 = sand.u32 %s34, 1
        %s300 = smul.addr %s299, 128
        %s301 = scalar_lea.vmem [#allocation2], %s300
        %p302 = pneg %p47
        %p303 = pneg %p44
        %s304 = sand.u32 %s26, 1
        %s305 = scalar_lea.sflag [#allocation6], %s304
        %s306 = sand.u32 %s60, 1
        %s307 = smul.addr %s306, 128
        %s308 = scalar_lea.vmem [#allocation5], %s307
        %p309 = pneg %p73
        %p310 = pneg %p70
        %p311 = pneg %p94
        %p312 = pneg %p91
        %p313 = pneg %p115
        %p314 = pneg %p112
        %p315 = pneg %p136
        %p316 = pneg %p133
        %p317 = pneg %p157
        %p318 = pneg %p154
        %p319 = pneg %p183
        %p320 = pneg %p180
        %s321 = sand.u32 %s170, 1
        %s322 = scalar_lea.sflag [#allocation4], %s321
        %s323 = sand.u32 %s170, 1
        %s324 = smul.addr %s323, 256
        %s325 = scalar_lea.vmem [#allocation8], %s324
        %s326 = smul.u32 16, %s26
        %s327 = smul.u32 16, %s26
        %s328 = smul.u32 16, %s26
        %v330 = vld [vmem:[%s3] sm:$0x3]
        %v331 = vld [vmem:[%s4] sm:$0x3]
        %v332 = vld [vmem:[%s5] sm:$0x3]
        %v333 = vld [vmem:[#allocation7] sm:$0xff]
        %v334 = vld [vmem:[#allocation7 + $0x8] sm:$0xff]
        %v335 = vld [vmem:[#allocation7 + $0x10] sm:$0xff]
        %v336 = vld [vmem:[#allocation7 + $0x18] sm:$0xff]
        %v337 = vld [vmem:[#allocation7 + $0x20] sm:$0xff]
        %v338 = vld [vmem:[#allocation7 + $0x28] sm:$0xff]
        %v339 = vld [vmem:[#allocation7 + $0x30] sm:$0xff]
        %v340 = vld [vmem:[#allocation7 + $0x38] sm:$0xff]
        %v341 = vld [vmem:[#allocation7 + $0x40] sm:$0xff]
        %v342 = vld [vmem:[#allocation7 + $0x48] sm:$0xff]
        %v343 = vld [vmem:[#allocation7 + $0x50] sm:$0xff]
        %v344 = vld [vmem:[#allocation7 + $0x58] sm:$0xff]
        %v345 = vld [vmem:[#allocation7 + $0x60] sm:$0xff]
        %v346 = vld [vmem:[#allocation7 + $0x68] sm:$0xff]
        %v347 = vld [vmem:[#allocation7 + $0x70] sm:$0xff]
        %v348 = vld [vmem:[#allocation7 + $0x78] sm:$0xff]
        %v349 = vld [vmem:[#allocation7 + $0x80] sm:$0xff]
        %v350 = vld [vmem:[#allocation7 + $0x88] sm:$0xff]
        %v351 = vld [vmem:[#allocation7 + $0x90] sm:$0xff]
        %v352 = vld [vmem:[#allocation7 + $0x98] sm:$0xff]
        %v353 = vld [vmem:[#allocation7 + $0xa0] sm:$0xff]
        %v354 = vld [vmem:[#allocation7 + $0xa8] sm:$0xff]
        %v355 = vld [vmem:[#allocation7 + $0xb0] sm:$0xff]
        %v356 = vld [vmem:[#allocation7 + $0xb8] sm:$0xff]
        %v357 = vld [vmem:[#allocation7 + $0xc0] sm:$0xff]
        %v358 = vld [vmem:[#allocation7 + $0xc8] sm:$0xff]
        %v359 = vld [vmem:[#allocation7 + $0xd0] sm:$0xff]
        %v360 = vld [vmem:[#allocation7 + $0xd8] sm:$0xff]
        %v361 = vld [vmem:[#allocation7 + $0xe0] sm:$0xff]
        %v362 = vld [vmem:[#allocation7 + $0xe8] sm:$0xff]
        %v363 = vld [vmem:[#allocation7 + $0xf0] sm:$0xff]
        %v364 = vld [vmem:[#allocation7 + $0xf8] sm:$0xff]
        %v365 = vld [vmem:[%s279] sm:$0xff]
        %v366 = vld [vmem:[%s279 + $0x8] sm:$0xff]
        %v367 = vld [vmem:[%s279 + $0x10] sm:$0xff]
        %v368 = vld [vmem:[%s279 + $0x18] sm:$0xff]
        %v369 = vld [vmem:[%s279 + $0x20] sm:$0xff]
        %v370 = vld [vmem:[%s279 + $0x28] sm:$0xff]
        %v371 = vld [vmem:[%s279 + $0x30] sm:$0xff]
        %v372 = vld [vmem:[%s279 + $0x38] sm:$0xff]
        %v373 = vld [vmem:[%s279 + $0x40] sm:$0xff]
        %v374 = vld [vmem:[%s279 + $0x48] sm:$0xff]
        %v375 = vld [vmem:[%s279 + $0x50] sm:$0xff]
        %v376 = vld [vmem:[%s279 + $0x58] sm:$0xff]
        %v377 = vld [vmem:[%s279 + $0x60] sm:$0xff]
        %v378 = vld [vmem:[%s279 + $0x68] sm:$0xff]
        %v379 = vld [vmem:[%s279 + $0x70] sm:$0xff]
        %v380 = vld [vmem:[%s279 + $0x78] sm:$0xff]
        %v381 = vunpack.c.l.bf16 %v365
        %v382 = vunpack.c.h.bf16 %v365
        %v383 = vunpack.c.l.bf16 %v366
        %v384 = vunpack.c.h.bf16 %v366
        %v385 = vunpack.c.l.bf16 %v367
        %v386 = vunpack.c.h.bf16 %v367
        %v387 = vunpack.c.l.bf16 %v368
        %v388 = vunpack.c.h.bf16 %v368
        %v389 = vunpack.c.l.bf16 %v369
        %v390 = vunpack.c.h.bf16 %v369
        %v391 = vunpack.c.l.bf16 %v370
        %v392 = vunpack.c.h.bf16 %v370
        %v393 = vunpack.c.l.bf16 %v371
        %v394 = vunpack.c.h.bf16 %v371
        %v395 = vunpack.c.l.bf16 %v372
        %v396 = vunpack.c.h.bf16 %v372
        %v397 = vunpack.c.l.bf16 %v373
        %v398 = vunpack.c.h.bf16 %v373
        %v399 = vunpack.c.l.bf16 %v374
        %v400 = vunpack.c.h.bf16 %v374
        %v401 = vunpack.c.l.bf16 %v375
        %v402 = vunpack.c.h.bf16 %v375
        %v403 = vunpack.c.l.bf16 %v376
        %v404 = vunpack.c.h.bf16 %v376
        %v405 = vunpack.c.l.bf16 %v377
        %v406 = vunpack.c.h.bf16 %v377
        %v407 = vunpack.c.l.bf16 %v378
        %v408 = vunpack.c.h.bf16 %v378
        %v409 = vunpack.c.l.bf16 %v379
        %v410 = vunpack.c.h.bf16 %v379
        %v411 = vunpack.c.l.bf16 %v380
        %v412 = vunpack.c.h.bf16 %v380
        %v414 = vlaneseq
        %v415 = vshrl.u32 %v414, 7
        %v416 = vsub.s32 0, %v415
        %v417 = vrot.slane %v330, %v416
        %v418 = vlaneseq
        %v419 = vshrl.u32 %v418, 7
        %v420 = vsub.s32 1, %v419
        %v421 = vrot.slane %v330, %v420
        %v424 = vsub.f32 %v381, %v417
        %v425 = vsub.f32 %v382, %v421
        %v426 = vsub.f32 %v383, %v417
        %v427 = vsub.f32 %v384, %v421
        %v428 = vsub.f32 %v385, %v417
        %v429 = vsub.f32 %v386, %v421
        %v430 = vsub.f32 %v387, %v417
        %v431 = vsub.f32 %v388, %v421
        %v432 = vsub.f32 %v389, %v417
        %v433 = vsub.f32 %v390, %v421
        %v434 = vsub.f32 %v391, %v417
        %v435 = vsub.f32 %v392, %v421
        %v436 = vsub.f32 %v393, %v417
        %v437 = vsub.f32 %v394, %v421
        %v438 = vsub.f32 %v395, %v417
        %v439 = vsub.f32 %v396, %v421
        %v440 = vsub.f32 %v397, %v417
        %v441 = vsub.f32 %v398, %v421
        %v442 = vsub.f32 %v399, %v417
        %v443 = vsub.f32 %v400, %v421
        %v444 = vsub.f32 %v401, %v417
        %v445 = vsub.f32 %v402, %v421
        %v446 = vsub.f32 %v403, %v417
        %v447 = vsub.f32 %v404, %v421
        %v448 = vsub.f32 %v405, %v417
        %v449 = vsub.f32 %v406, %v421
        %v450 = vsub.f32 %v407, %v417
        %v451 = vsub.f32 %v408, %v421
        %v452 = vsub.f32 %v409, %v417
        %v453 = vsub.f32 %v410, %v421
        %v454 = vsub.f32 %v411, %v417
        %v455 = vsub.f32 %v412, %v421
        %v457 = vlaneseq
        %v458 = vshrl.u32 %v457, 7
        %v459 = vsub.s32 0, %v458
        %v460 = vrot.slane %v332, %v459
        %v461 = vlaneseq
        %v462 = vshrl.u32 %v461, 7
        %v463 = vsub.s32 1, %v462
        %v464 = vrot.slane %v332, %v463
        %v467 = vmul.f32 %v424, %v460
        %v468 = vmul.f32 %v425, %v464
        %v469 = vmul.f32 %v426, %v460
        %v470 = vmul.f32 %v427, %v464
        %v471 = vmul.f32 %v428, %v460
        %v472 = vmul.f32 %v429, %v464
        %v473 = vmul.f32 %v430, %v460
        %v474 = vmul.f32 %v431, %v464
        %v475 = vmul.f32 %v432, %v460
        %v476 = vmul.f32 %v433, %v464
        %v477 = vmul.f32 %v434, %v460
        %v478 = vmul.f32 %v435, %v464
        %v479 = vmul.f32 %v436, %v460
        %v480 = vmul.f32 %v437, %v464
        %v481 = vmul.f32 %v438, %v460
        %v482 = vmul.f32 %v439, %v464
        %v483 = vmul.f32 %v440, %v460
        %v484 = vmul.f32 %v441, %v464
        %v485 = vmul.f32 %v442, %v460
        %v486 = vmul.f32 %v443, %v464
        %v487 = vmul.f32 %v444, %v460
        %v488 = vmul.f32 %v445, %v464
        %v489 = vmul.f32 %v446, %v460
        %v490 = vmul.f32 %v447, %v464
        %v491 = vmul.f32 %v448, %v460
        %v492 = vmul.f32 %v449, %v464
        %v493 = vmul.f32 %v450, %v460
        %v494 = vmul.f32 %v451, %v464
        %v495 = vmul.f32 %v452, %v460
        %v496 = vmul.f32 %v453, %v464
        %v497 = vmul.f32 %v454, %v460
        %v498 = vmul.f32 %v455, %v464
        %v499 = vpack.c.bf16 %v469, %v467
        %v500 = vpack.c.bf16 %v470, %v468
        %v501 = vpack.c.bf16 %v473, %v471
        %v502 = vpack.c.bf16 %v474, %v472
        %v503 = vpack.c.bf16 %v477, %v475
        %v504 = vpack.c.bf16 %v478, %v476
        %v505 = vpack.c.bf16 %v481, %v479
        %v506 = vpack.c.bf16 %v482, %v480
        %v507 = vpack.c.bf16 %v485, %v483
        %v508 = vpack.c.bf16 %v486, %v484
        %v509 = vpack.c.bf16 %v489, %v487
        %v510 = vpack.c.bf16 %v490, %v488
        %v511 = vpack.c.bf16 %v493, %v491
        %v512 = vpack.c.bf16 %v494, %v492
        %v513 = vpack.c.bf16 %v497, %v495
        %v514 = vpack.c.bf16 %v498, %v496
        %v515 = vld [vmem:[%s288] sm:$0xff]
        %v516 = vld [vmem:[%s288 + $0x8] sm:$0xff]
        %v517 = vld [vmem:[%s288 + $0x10] sm:$0xff]
        %v518 = vld [vmem:[%s288 + $0x18] sm:$0xff]
        %v519 = vld [vmem:[%s288 + $0x20] sm:$0xff]
        %v520 = vld [vmem:[%s288 + $0x28] sm:$0xff]
        %v521 = vld [vmem:[%s288 + $0x30] sm:$0xff]
        %v522 = vld [vmem:[%s288 + $0x38] sm:$0xff]
        %v523 = vld [vmem:[%s288 + $0x40] sm:$0xff]
        %v524 = vld [vmem:[%s288 + $0x48] sm:$0xff]
        %v525 = vld [vmem:[%s288 + $0x50] sm:$0xff]
        %v526 = vld [vmem:[%s288 + $0x58] sm:$0xff]
        %v527 = vld [vmem:[%s288 + $0x60] sm:$0xff]
        %v528 = vld [vmem:[%s288 + $0x68] sm:$0xff]
        %v529 = vld [vmem:[%s288 + $0x70] sm:$0xff]
        %v530 = vld [vmem:[%s288 + $0x78] sm:$0xff]
        %v531 = vunpack.c.l.bf16 %v515
        %v532 = vunpack.c.h.bf16 %v515
        %v533 = vunpack.c.l.bf16 %v516
        %v534 = vunpack.c.h.bf16 %v516
        %v535 = vunpack.c.l.bf16 %v517
        %v536 = vunpack.c.h.bf16 %v517
        %v537 = vunpack.c.l.bf16 %v518
        %v538 = vunpack.c.h.bf16 %v518
        %v539 = vunpack.c.l.bf16 %v519
        %v540 = vunpack.c.h.bf16 %v519
        %v541 = vunpack.c.l.bf16 %v520
        %v542 = vunpack.c.h.bf16 %v520
        %v543 = vunpack.c.l.bf16 %v521
        %v544 = vunpack.c.h.bf16 %v521
        %v545 = vunpack.c.l.bf16 %v522
        %v546 = vunpack.c.h.bf16 %v522
        %v547 = vunpack.c.l.bf16 %v523
        %v548 = vunpack.c.h.bf16 %v523
        %v549 = vunpack.c.l.bf16 %v524
        %v550 = vunpack.c.h.bf16 %v524
        %v551 = vunpack.c.l.bf16 %v525
        %v552 = vunpack.c.h.bf16 %v525
        %v553 = vunpack.c.l.bf16 %v526
        %v554 = vunpack.c.h.bf16 %v526
        %v555 = vunpack.c.l.bf16 %v527
        %v556 = vunpack.c.h.bf16 %v527
        %v557 = vunpack.c.l.bf16 %v528
        %v558 = vunpack.c.h.bf16 %v528
        %v559 = vunpack.c.l.bf16 %v529
        %v560 = vunpack.c.h.bf16 %v529
        %v561 = vunpack.c.l.bf16 %v530
        %v562 = vunpack.c.h.bf16 %v530
        %v563 = vsub.f32 %v531, %v417
        %v564 = vsub.f32 %v532, %v421
        %v565 = vsub.f32 %v533, %v417
        %v566 = vsub.f32 %v534, %v421
        %v567 = vsub.f32 %v535, %v417
        %v568 = vsub.f32 %v536, %v421
        %v569 = vsub.f32 %v537, %v417
        %v570 = vsub.f32 %v538, %v421
        %v571 = vsub.f32 %v539, %v417
        %v572 = vsub.f32 %v540, %v421
        %v573 = vsub.f32 %v541, %v417
        %v574 = vsub.f32 %v542, %v421
        %v575 = vsub.f32 %v543, %v417
        %v576 = vsub.f32 %v544, %v421
        %v577 = vsub.f32 %v545, %v417
        %v578 = vsub.f32 %v546, %v421
        %v579 = vsub.f32 %v547, %v417
        %v580 = vsub.f32 %v548, %v421
        %v581 = vsub.f32 %v549, %v417
        %v582 = vsub.f32 %v550, %v421
        %v583 = vsub.f32 %v551, %v417
        %v584 = vsub.f32 %v552, %v421
        %v585 = vsub.f32 %v553, %v417
        %v586 = vsub.f32 %v554, %v421
        %v587 = vsub.f32 %v555, %v417
        %v588 = vsub.f32 %v556, %v421
        %v589 = vsub.f32 %v557, %v417
        %v590 = vsub.f32 %v558, %v421
        %v591 = vsub.f32 %v559, %v417
        %v592 = vsub.f32 %v560, %v421
        %v593 = vsub.f32 %v561, %v417
        %v594 = vsub.f32 %v562, %v421
        %v595 = vmul.f32 %v563, %v460
        %v596 = vmul.f32 %v564, %v464
        %v597 = vmul.f32 %v565, %v460
        %v598 = vmul.f32 %v566, %v464
        %v599 = vmul.f32 %v567, %v460
        %v600 = vmul.f32 %v568, %v464
        %v601 = vmul.f32 %v569, %v460
        %v602 = vmul.f32 %v570, %v464
        %v603 = vmul.f32 %v571, %v460
        %v604 = vmul.f32 %v572, %v464
        %v605 = vmul.f32 %v573, %v460
        %v606 = vmul.f32 %v574, %v464
        %v607 = vmul.f32 %v575, %v460
        %v608 = vmul.f32 %v576, %v464
        %v609 = vmul.f32 %v577, %v460
        %v610 = vmul.f32 %v578, %v464
        %v611 = vmul.f32 %v579, %v460
        %v612 = vmul.f32 %v580, %v464
        %v613 = vmul.f32 %v581, %v460
        %v614 = vmul.f32 %v582, %v464
        %v615 = vmul.f32 %v583, %v460
        %v616 = vmul.f32 %v584, %v464
        %v617 = vmul.f32 %v585, %v460
        %v618 = vmul.f32 %v586, %v464
        %v619 = vmul.f32 %v587, %v460
        %v620 = vmul.f32 %v588, %v464
        %v621 = vmul.f32 %v589, %v460
        %v622 = vmul.f32 %v590, %v464
        %v623 = vmul.f32 %v591, %v460
        %v624 = vmul.f32 %v592, %v464
        %v625 = vmul.f32 %v593, %v460
        %v626 = vmul.f32 %v594, %v464
        %v627 = vpack.c.bf16 %v597, %v595
        %v628 = vpack.c.bf16 %v598, %v596
        %v629 = vpack.c.bf16 %v601, %v599
        %v630 = vpack.c.bf16 %v602, %v600
        %v631 = vpack.c.bf16 %v605, %v603
        %v632 = vpack.c.bf16 %v606, %v604
        %v633 = vpack.c.bf16 %v609, %v607
        %v634 = vpack.c.bf16 %v610, %v608
        %v635 = vpack.c.bf16 %v613, %v611
        %v636 = vpack.c.bf16 %v614, %v612
        %v637 = vpack.c.bf16 %v617, %v615
        %v638 = vpack.c.bf16 %v618, %v616
        %v639 = vpack.c.bf16 %v621, %v619
        %v640 = vpack.c.bf16 %v622, %v620
        %v641 = vpack.c.bf16 %v625, %v623
        %v642 = vpack.c.bf16 %v626, %v624
        %v675 = vunpack.c.l.b16 %v333
        %v676 = vunpack.c.h.b16 %v333
        %v677 = vunpack.c.l.b16 %v334
        %v678 = vunpack.c.h.b16 %v334
        %v679 = vunpack.c.l.b16 %v335
        %v680 = vunpack.c.h.b16 %v335
        %v681 = vunpack.c.l.b16 %v336
        %v682 = vunpack.c.h.b16 %v336
        %v683 = vunpack.c.l.b16 %v337
        %v684 = vunpack.c.h.b16 %v337
        %v685 = vunpack.c.l.b16 %v338
        %v686 = vunpack.c.h.b16 %v338
        %v687 = vunpack.c.l.b16 %v339
        %v688 = vunpack.c.h.b16 %v339
        %v689 = vunpack.c.l.b16 %v340
        %v690 = vunpack.c.h.b16 %v340
        %v691 = vunpack.c.l.b16 %v341
        %v692 = vunpack.c.h.b16 %v341
        %v693 = vunpack.c.l.b16 %v342
        %v694 = vunpack.c.h.b16 %v342
        %v695 = vunpack.c.l.b16 %v343
        %v696 = vunpack.c.h.b16 %v343
        %v697 = vunpack.c.l.b16 %v344
        %v698 = vunpack.c.h.b16 %v344
        %v699 = vunpack.c.l.b16 %v345
        %v700 = vunpack.c.h.b16 %v345
        %v701 = vunpack.c.l.b16 %v346
        %v702 = vunpack.c.h.b16 %v346
        %v703 = vunpack.c.l.b16 %v347
        %v704 = vunpack.c.h.b16 %v347
        %v705 = vunpack.c.l.b16 %v348
        %v706 = vunpack.c.h.b16 %v348
        %v707 = vunpack.c.l.b16 %v349
        %v708 = vunpack.c.h.b16 %v349
        %v709 = vunpack.c.l.b16 %v350
        %v710 = vunpack.c.h.b16 %v350
        %v711 = vunpack.c.l.b16 %v351
        %v712 = vunpack.c.h.b16 %v351
        %v713 = vunpack.c.l.b16 %v352
        %v714 = vunpack.c.h.b16 %v352
        %v715 = vunpack.c.l.b16 %v353
        %v716 = vunpack.c.h.b16 %v353
        %v717 = vunpack.c.l.b16 %v354
        %v718 = vunpack.c.h.b16 %v354
        %v719 = vunpack.c.l.b16 %v355
        %v720 = vunpack.c.h.b16 %v355
        %v721 = vunpack.c.l.b16 %v356
        %v722 = vunpack.c.h.b16 %v356
        %v723 = vunpack.c.l.b16 %v357
        %v724 = vunpack.c.h.b16 %v357
        %v725 = vunpack.c.l.b16 %v358
        %v726 = vunpack.c.h.b16 %v358
        %v727 = vunpack.c.l.b16 %v359
        %v728 = vunpack.c.h.b16 %v359
        %v729 = vunpack.c.l.b16 %v360
        %v730 = vunpack.c.h.b16 %v360
        %v731 = vunpack.c.l.b16 %v361
        %v732 = vunpack.c.h.b16 %v361
        %v733 = vunpack.c.l.b16 %v362
        %v734 = vunpack.c.h.b16 %v362
        %v735 = vunpack.c.l.b16 %v363
        %v736 = vunpack.c.h.b16 %v363
        %v737 = vunpack.c.l.b16 %v364
        %v738 = vunpack.c.h.b16 %v364
        %v739 = vpack.c.b16 %v677, %v675
        %v740 = vpack.c.b16 %v678, %v676
        %v741 = vpack.c.b16 %v681, %v679
        %v742 = vpack.c.b16 %v682, %v680
        %v743 = vpack.c.b16 %v685, %v683
        %v744 = vpack.c.b16 %v686, %v684
        %v745 = vpack.c.b16 %v689, %v687
        %v746 = vpack.c.b16 %v690, %v688
        %v747 = vpack.c.b16 %v693, %v691
        %v748 = vpack.c.b16 %v694, %v692
        %v749 = vpack.c.b16 %v697, %v695
        %v750 = vpack.c.b16 %v698, %v696
        %v751 = vpack.c.b16 %v701, %v699
        %v752 = vpack.c.b16 %v702, %v700
        %v753 = vpack.c.b16 %v705, %v703
        %v754 = vpack.c.b16 %v706, %v704
        %v755 = vpack.c.b16 %v709, %v707
        %v756 = vpack.c.b16 %v710, %v708
        %v757 = vpack.c.b16 %v713, %v711
        %v758 = vpack.c.b16 %v714, %v712
        %v759 = vpack.c.b16 %v717, %v715
        %v760 = vpack.c.b16 %v718, %v716
        %v761 = vpack.c.b16 %v721, %v719
        %v762 = vpack.c.b16 %v722, %v720
        %v763 = vpack.c.b16 %v725, %v723
        %v764 = vpack.c.b16 %v726, %v724
        %v765 = vpack.c.b16 %v729, %v727
        %v766 = vpack.c.b16 %v730, %v728
        %v767 = vpack.c.b16 %v733, %v731
        %v768 = vpack.c.b16 %v734, %v732
        %v769 = vpack.c.b16 %v737, %v735
        %v770 = vpack.c.b16 %v738, %v736
        %803 = vmatprep.subr.bf16.mxu0 %v740
        %804 = vmatpush1.bf16.xpose.msra.mxu0 %v739
        %805 = vmatprep.subr.bf16.mxu0 %v742
        %806 = vmatpush1.bf16.xpose.msra.mxu0 %v741
        %807 = vmatprep.subr.bf16.mxu0 %v744
        %808 = vmatpush1.bf16.xpose.msra.mxu0 %v743
        %809 = vmatprep.subr.bf16.mxu0 %v746
        %810 = vmatpush1.bf16.xpose.msra.mxu0 %v745
        %811 = vmatprep.subr.bf16.mxu0 %v748
        %812 = vmatpush1.bf16.xpose.msra.mxu0 %v747
        %813 = vmatprep.subr.bf16.mxu0 %v750
        %814 = vmatpush1.bf16.xpose.msra.mxu0 %v749
        %815 = vmatprep.subr.bf16.mxu0 %v752
        %816 = vmatpush1.bf16.xpose.msra.mxu0 %v751
        %817 = vmatprep.subr.bf16.mxu0 %v754
        %818 = vmatpush1.bf16.xpose.msra.mxu0 %v753
        %819 = vmatprep.subr.bf16.mxu0 %v756
        %820 = vmatpush1.bf16.xpose.msra.mxu0 %v755
        %821 = vmatprep.subr.bf16.mxu0 %v758
        %822 = vmatpush1.bf16.xpose.msra.mxu0 %v757
        %823 = vmatprep.subr.bf16.mxu0 %v760
        %824 = vmatpush1.bf16.xpose.msra.mxu0 %v759
        %825 = vmatprep.subr.bf16.mxu0 %v762
        %826 = vmatpush1.bf16.xpose.msra.mxu0 %v761
        %827 = vmatprep.subr.bf16.mxu0 %v764
        %828 = vmatpush1.bf16.xpose.msra.mxu0 %v763
        %829 = vmatprep.subr.bf16.mxu0 %v766
        %830 = vmatpush1.bf16.xpose.msra.mxu0 %v765
        %831 = vmatprep.subr.bf16.mxu0 %v768
        %832 = vmatpush1.bf16.xpose.msra.mxu0 %v767
        %833 = vmatprep.subr.bf16.mxu0 %v770
        %834 = vmatpush1.bf16.xpose.msra.mxu0 %v769
        %835 = vmatprep.mubr.bf16.mxu0 %v500
        %836 = vmatmul.mubr.bf16.gmra.mrb[0].mxu0 %v499
        %v837 = vpop.f32.mrb[0].mxu0
        %v838 = vadd.f32 0.0, %v837
        %v839 = vpop.f32.mrb[0].mxu0
        %v840 = vadd.f32 0.0, %v839
        %v841 = vpop.f32.mrb[0].mxu0
        %v842 = vadd.f32 0.0, %v841
        %v843 = vpop.f32.mrb[0].mxu0
        %v844 = vadd.f32 0.0, %v843
        %845 = vmatprep.mubr.bf16.mxu0 %v502
        %846 = vmatmul.mubr.bf16.gmra.mrb[0].mxu0 %v501
        %v847 = vpop.f32.mrb[0].mxu0
        %v848 = vadd.f32 0.0, %v847
        %v849 = vpop.f32.mrb[0].mxu0
        %v850 = vadd.f32 0.0, %v849
        %v851 = vpop.f32.mrb[0].mxu0
        %v852 = vadd.f32 0.0, %v851
        %v853 = vpop.f32.mrb[0].mxu0
        %v854 = vadd.f32 0.0, %v853
        %855 = vmatprep.mubr.bf16.mxu0 %v504
        %856 = vmatmul.mubr.bf16.gmra.mrb[0].mxu0 %v503
        %v857 = vpop.f32.mrb[0].mxu0
        %v858 = vadd.f32 0.0, %v857
        %v859 = vpop.f32.mrb[0].mxu0
        %v860 = vadd.f32 0.0, %v859
        %v861 = vpop.f32.mrb[0].mxu0
        %v862 = vadd.f32 0.0, %v861
        %v863 = vpop.f32.mrb[0].mxu0
        %v864 = vadd.f32 0.0, %v863
        %865 = vmatprep.mubr.bf16.mxu0 %v506
        %866 = vmatmul.mubr.bf16.gmra.mrb[0].mxu0 %v505
        %v867 = vpop.f32.mrb[0].mxu0
        %v868 = vadd.f32 0.0, %v867
        %v869 = vpop.f32.mrb[0].mxu0
        %v870 = vadd.f32 0.0, %v869
        %v871 = vpop.f32.mrb[0].mxu0
        %v872 = vadd.f32 0.0, %v871
        %v873 = vpop.f32.mrb[0].mxu0
        %v874 = vadd.f32 0.0, %v873
        %875 = vmatprep.mubr.bf16.mxu0 %v508
        %876 = vmatmul.mubr.bf16.gmra.mrb[0].mxu0 %v507
        %v877 = vpop.f32.mrb[0].mxu0
        %v878 = vadd.f32 0.0, %v877
        %v879 = vpop.f32.mrb[0].mxu0
        %v880 = vadd.f32 0.0, %v879
        %v881 = vpop.f32.mrb[0].mxu0
        %v882 = vadd.f32 0.0, %v881
        %v883 = vpop.f32.mrb[0].mxu0
        %v884 = vadd.f32 0.0, %v883
        %885 = vmatprep.mubr.bf16.mxu0 %v510
        %886 = vmatmul.mubr.bf16.gmra.mrb[0].mxu0 %v509
        %v887 = vpop.f32.mrb[0].mxu0
        %v888 = vadd.f32 0.0, %v887
        %v889 = vpop.f32.mrb[0].mxu0
        %v890 = vadd.f32 0.0, %v889
        %v891 = vpop.f32.mrb[0].mxu0
        %v892 = vadd.f32 0.0, %v891
        %v893 = vpop.f32.mrb[0].mxu0
        %v894 = vadd.f32 0.0, %v893
        %895 = vmatprep.mubr.bf16.mxu0 %v512
        %896 = vmatmul.mubr.bf16.gmra.mrb[0].mxu0 %v511
        %v897 = vpop.f32.mrb[0].mxu0
        %v898 = vadd.f32 0.0, %v897
        %v899 = vpop.f32.mrb[0].mxu0
        %v900 = vadd.f32 0.0, %v899
        %v901 = vpop.f32.mrb[0].mxu0
        %v902 = vadd.f32 0.0, %v901
        %v903 = vpop.f32.mrb[0].mxu0
        %v904 = vadd.f32 0.0, %v903
        %905 = vmatprep.mubr.bf16.mxu0 %v514
        %906 = vmatmul.mubr.bf16.gmra.mrb[0].mxu0 %v513
        %v907 = vpop.f32.mrb[0].mxu0
        %v908 = vadd.f32 0.0, %v907
        %v909 = vpop.f32.mrb[0].mxu0
        %v910 = vadd.f32 0.0, %v909
        %v911 = vpop.f32.mrb[0].mxu0
        %v912 = vadd.f32 0.0, %v911
        %v913 = vpop.f32.mrb[0].mxu0
        %v914 = vadd.f32 0.0, %v913
        %915 = vdwg.mxu0
        %916 = vmatprep.subr.bf16.mxu0 %v740
        %917 = vmatpush1.bf16.xpose.msra.mxu0 %v739
        %918 = vmatprep.subr.bf16.mxu0 %v742
        %919 = vmatpush1.bf16.xpose.msra.mxu0 %v741
        %920 = vmatprep.subr.bf16.mxu0 %v744
        %921 = vmatpush1.bf16.xpose.msra.mxu0 %v743
        %922 = vmatprep.subr.bf16.mxu0 %v746
        %923 = vmatpush1.bf16.xpose.msra.mxu0 %v745
        %924 = vmatprep.subr.bf16.mxu0 %v748
        %925 = vmatpush1.bf16.xpose.msra.mxu0 %v747
        %926 = vmatprep.subr.bf16.mxu0 %v750
        %927 = vmatpush1.bf16.xpose.msra.mxu0 %v749
        %928 = vmatprep.subr.bf16.mxu0 %v752
        %929 = vmatpush1.bf16.xpose.msra.mxu0 %v751
        %930 = vmatprep.subr.bf16.mxu0 %v754
        %931 = vmatpush1.bf16.xpose.msra.mxu0 %v753
        %932 = vmatprep.subr.bf16.mxu0 0
        %933 = vmatpush1.bf16.xpose.msra.mxu0 0
        %934 = vmatprep.subr.bf16.mxu0 0
        %935 = vmatpush1.bf16.xpose.msra.mxu0 0
        %936 = vmatprep.subr.bf16.mxu0 0
        %937 = vmatpush1.bf16.xpose.msra.mxu0 0
        %938 = vmatprep.subr.bf16.mxu0 0
        %939 = vmatpush1.bf16.xpose.msra.mxu0 0
        %940 = vmatprep.subr.bf16.mxu0 0
        %941 = vmatpush1.bf16.xpose.msra.mxu0 0
        %942 = vmatprep.subr.bf16.mxu0 0
        %943 = vmatpush1.bf16.xpose.msra.mxu0 0
        %944 = vmatprep.subr.bf16.mxu0 0
        %945 = vmatpush1.bf16.xpose.msra.mxu0 0
        %946 = vmatprep.subr.bf16.mxu0 0
        %947 = vmatpush1.bf16.xpose.msra.mxu0 0
        %948 = vmatprep.mubr.bf16.mxu0 %v628
        %949 = vmatmul.mubr.bf16.gmra.mrb[0].mxu0 %v627
        %v950 = vpop.f32.mrb[0].mxu0
        %v951 = vadd.f32 0.0, %v950
        %v952 = vpop.f32.mrb[0].mxu0
        %v953 = vpop.f32.mrb[0].mxu0
        %v954 = vadd.f32 0.0, %v953
        %v955 = vpop.f32.mrb[0].mxu0
        %956 = vmatprep.mubr.bf16.mxu0 %v630
        %957 = vmatmul.mubr.bf16.gmra.mrb[0].mxu0 %v629
        %v958 = vpop.f32.mrb[0].mxu0
        %v959 = vadd.f32 0.0, %v958
        %v960 = vpop.f32.mrb[0].mxu0
        %v961 = vpop.f32.mrb[0].mxu0
        %v962 = vadd.f32 0.0, %v961
        %v963 = vpop.f32.mrb[0].mxu0
        %964 = vmatprep.mubr.bf16.mxu0 %v632
        %965 = vmatmul.mubr.bf16.gmra.mrb[0].mxu0 %v631
        %v966 = vpop.f32.mrb[0].mxu0
        %v967 = vadd.f32 0.0, %v966
        %v968 = vpop.f32.mrb[0].mxu0
        %v969 = vpop.f32.mrb[0].mxu0
        %v970 = vadd.f32 0.0, %v969
        %v971 = vpop.f32.mrb[0].mxu0
        %972 = vmatprep.mubr.bf16.mxu0 %v634
        %973 = vmatmul.mubr.bf16.gmra.mrb[0].mxu0 %v633
        %v974 = vpop.f32.mrb[0].mxu0
        %v975 = vadd.f32 0.0, %v974
        %v976 = vpop.f32.mrb[0].mxu0
        %v977 = vpop.f32.mrb[0].mxu0
        %v978 = vadd.f32 0.0, %v977
        %v979 = vpop.f32.mrb[0].mxu0
        %980 = vmatprep.mubr.bf16.mxu0 %v636
        %981 = vmatmul.mubr.bf16.gmra.mrb[0].mxu0 %v635
        %v982 = vpop.f32.mrb[0].mxu0
        %v983 = vadd.f32 0.0, %v982
        %v984 = vpop.f32.mrb[0].mxu0
        %v985 = vpop.f32.mrb[0].mxu0
        %v986 = vadd.f32 0.0, %v985
        %v987 = vpop.f32.mrb[0].mxu0
        %988 = vmatprep.mubr.bf16.mxu0 %v638
        %989 = vmatmul.mubr.bf16.gmra.mrb[0].mxu0 %v637
        %v990 = vpop.f32.mrb[0].mxu0
        %v991 = vadd.f32 0.0, %v990
        %v992 = vpop.f32.mrb[0].mxu0
        %v993 = vpop.f32.mrb[0].mxu0
        %v994 = vadd.f32 0.0, %v993
        %v995 = vpop.f32.mrb[0].mxu0
        %996 = vmatprep.mubr.bf16.mxu0 %v640
        %997 = vmatmul.mubr.bf16.gmra.mrb[0].mxu0 %v639
        %v998 = vpop.f32.mrb[0].mxu0
        %v999 = vadd.f32 0.0, %v998
        %v1000 = vpop.f32.mrb[0].mxu0
        %v1001 = vpop.f32.mrb[0].mxu0
        %v1002 = vadd.f32 0.0, %v1001
        %v1003 = vpop.f32.mrb[0].mxu0
        %1004 = vmatprep.mubr.bf16.mxu0 %v642
        %1005 = vmatmul.mubr.bf16.gmra.mrb[0].mxu0 %v641
        %v1006 = vpop.f32.mrb[0].mxu0
        %v1007 = vadd.f32 0.0, %v1006
        %v1008 = vpop.f32.mrb[0].mxu0
        %v1009 = vpop.f32.mrb[0].mxu0
        %v1010 = vadd.f32 0.0, %v1009
        %v1011 = vpop.f32.mrb[0].mxu0
        %1012 = vdwg.mxu0
        %v1013 = vlaneseq
        %v1014 = vand.u32 %v1013, 127
        %vm1015 = vcmp.lt.s32.totalorder %v1014, 10
        %v1016 = vsel %vm1015, %v951, %v838
        %v1017 = vsel %vm1015, %v954, %v842
        %v1018 = vsel %vm1015, %v959, %v848
        %v1019 = vsel %vm1015, %v962, %v852
        %v1020 = vsel %vm1015, %v967, %v858
        %v1021 = vsel %vm1015, %v970, %v862
        %v1022 = vsel %vm1015, %v975, %v868
        %v1023 = vsel %vm1015, %v978, %v872
        %v1024 = vsel %vm1015, %v983, %v878
        %v1025 = vsel %vm1015, %v986, %v882
        %v1026 = vsel %vm1015, %v991, %v888
        %v1027 = vsel %vm1015, %v994, %v892
        %v1028 = vsel %vm1015, %v999, %v898
        %v1029 = vsel %vm1015, %v1002, %v902
        %v1030 = vsel %vm1015, %v1007, %v908
        %v1031 = vsel %vm1015, %v1010, %v912
        %v1032 = vpack.c.bf16 %v1017, %v1016
        %v1033 = vpack.c.bf16 %v844, %v840
        %v1034 = vpack.c.bf16 %v1019, %v1018
        %v1035 = vpack.c.bf16 %v854, %v850
        %v1036 = vpack.c.bf16 %v1021, %v1020
        %v1037 = vpack.c.bf16 %v864, %v860
        %v1038 = vpack.c.bf16 %v1023, %v1022
        %v1039 = vpack.c.bf16 %v874, %v870
        %v1040 = vpack.c.bf16 %v1025, %v1024
        %v1041 = vpack.c.bf16 %v884, %v880
        %v1042 = vpack.c.bf16 %v1027, %v1026
        %v1043 = vpack.c.bf16 %v894, %v890
        %v1044 = vpack.c.bf16 %v1029, %v1028
        %v1045 = vpack.c.bf16 %v904, %v900
        %v1046 = vpack.c.bf16 %v1031, %v1030
        %v1047 = vpack.c.bf16 %v914, %v910
        %1048 = vmatprep.subr.bf16.mxu0 %v740
        %1049 = vmatpush1.bf16.msra.mxu0 %v739
        %1050 = vmatprep.subr.bf16.mxu0 %v742
        %1051 = vmatpush1.bf16.msra.mxu0 %v741
        %1052 = vmatprep.subr.bf16.mxu0 %v744
        %1053 = vmatpush1.bf16.msra.mxu0 %v743
        %1054 = vmatprep.subr.bf16.mxu0 %v746
        %1055 = vmatpush1.bf16.msra.mxu0 %v745
        %1056 = vmatprep.subr.bf16.mxu0 %v748
        %1057 = vmatpush1.bf16.msra.mxu0 %v747
        %1058 = vmatprep.subr.bf16.mxu0 %v750
        %1059 = vmatpush1.bf16.msra.mxu0 %v749
        %1060 = vmatprep.subr.bf16.mxu0 %v752
        %1061 = vmatpush1.bf16.msra.mxu0 %v751
        %1062 = vmatprep.subr.bf16.mxu0 %v754
        %1063 = vmatpush1.bf16.msra.mxu0 %v753
        %1064 = vmatprep.subr.bf16.mxu0 %v756
        %1065 = vmatpush1.bf16.msra.mxu0 %v755
        %1066 = vmatprep.subr.bf16.mxu0 %v758
        %1067 = vmatpush1.bf16.msra.mxu0 %v757
        %1068 = vmatprep.subr.bf16.mxu0 %v760
        %1069 = vmatpush1.bf16.msra.mxu0 %v759
        %1070 = vmatprep.subr.bf16.mxu0 %v762
        %1071 = vmatpush1.bf16.msra.mxu0 %v761
        %1072 = vmatprep.subr.bf16.mxu0 %v764
        %1073 = vmatpush1.bf16.msra.mxu0 %v763
        %1074 = vmatprep.subr.bf16.mxu0 %v766
        %1075 = vmatpush1.bf16.msra.mxu0 %v765
        %1076 = vmatprep.subr.bf16.mxu0 %v768
        %1077 = vmatpush1.bf16.msra.mxu0 %v767
        %1078 = vmatprep.subr.bf16.mxu0 %v770
        %1079 = vmatpush1.bf16.msra.mxu0 %v769
        %1080 = vmatprep.mubr.bf16.mxu0 %v1033
        %1081 = vmatmul.mubr.bf16.gmra.mrb[0].mxu0 %v1032
        %v1082 = vpop.f32.mrb[0].mxu0
        %v1083 = vadd.f32 0.0, %v1082
        %v1084 = vpop.f32.mrb[0].mxu0
        %v1085 = vadd.f32 0.0, %v1084
        %v1086 = vpop.f32.mrb[0].mxu0
        %v1087 = vadd.f32 0.0, %v1086
        %v1088 = vpop.f32.mrb[0].mxu0
        %v1089 = vadd.f32 0.0, %v1088
        %1090 = vmatprep.mubr.bf16.mxu0 %v1035
        %1091 = vmatmul.mubr.bf16.gmra.mrb[0].mxu0 %v1034
        %v1092 = vpop.f32.mrb[0].mxu0
        %v1093 = vadd.f32 0.0, %v1092
        %v1094 = vpop.f32.mrb[0].mxu0
        %v1095 = vadd.f32 0.0, %v1094
        %v1096 = vpop.f32.mrb[0].mxu0
        %v1097 = vadd.f32 0.0, %v1096
        %v1098 = vpop.f32.mrb[0].mxu0
        %v1099 = vadd.f32 0.0, %v1098
        %1100 = vmatprep.mubr.bf16.mxu0 %v1037
        %1101 = vmatmul.mubr.bf16.gmra.mrb[0].mxu0 %v1036
        %v1102 = vpop.f32.mrb[0].mxu0
        %v1103 = vadd.f32 0.0, %v1102
        %v1104 = vpop.f32.mrb[0].mxu0
        %v1105 = vadd.f32 0.0, %v1104
        %v1106 = vpop.f32.mrb[0].mxu0
        %v1107 = vadd.f32 0.0, %v1106
        %v1108 = vpop.f32.mrb[0].mxu0
        %v1109 = vadd.f32 0.0, %v1108
        %1110 = vmatprep.mubr.bf16.mxu0 %v1039
        %1111 = vmatmul.mubr.bf16.gmra.mrb[0].mxu0 %v1038
        %v1112 = vpop.f32.mrb[0].mxu0
        %v1113 = vadd.f32 0.0, %v1112
        %v1114 = vpop.f32.mrb[0].mxu0
        %v1115 = vadd.f32 0.0, %v1114
        %v1116 = vpop.f32.mrb[0].mxu0
        %v1117 = vadd.f32 0.0, %v1116
        %v1118 = vpop.f32.mrb[0].mxu0
        %v1119 = vadd.f32 0.0, %v1118
        %1120 = vmatprep.mubr.bf16.mxu0 %v1041
        %1121 = vmatmul.mubr.bf16.gmra.mrb[0].mxu0 %v1040
        %v1122 = vpop.f32.mrb[0].mxu0
        %v1123 = vadd.f32 0.0, %v1122
        %v1124 = vpop.f32.mrb[0].mxu0
        %v1125 = vadd.f32 0.0, %v1124
        %v1126 = vpop.f32.mrb[0].mxu0
        %v1127 = vadd.f32 0.0, %v1126
        %v1128 = vpop.f32.mrb[0].mxu0
        %v1129 = vadd.f32 0.0, %v1128
        %1130 = vmatprep.mubr.bf16.mxu0 %v1043
        %1131 = vmatmul.mubr.bf16.gmra.mrb[0].mxu0 %v1042
        %v1132 = vpop.f32.mrb[0].mxu0
        %v1133 = vadd.f32 0.0, %v1132
        %v1134 = vpop.f32.mrb[0].mxu0
        %v1135 = vadd.f32 0.0, %v1134
        %v1136 = vpop.f32.mrb[0].mxu0
        %v1137 = vadd.f32 0.0, %v1136
        %v1138 = vpop.f32.mrb[0].mxu0
        %v1139 = vadd.f32 0.0, %v1138
        %1140 = vmatprep.mubr.bf16.mxu0 %v1045
        %1141 = vmatmul.mubr.bf16.gmra.mrb[0].mxu0 %v1044
        %v1142 = vpop.f32.mrb[0].mxu0
        %v1143 = vadd.f32 0.0, %v1142
        %v1144 = vpop.f32.mrb[0].mxu0
        %v1145 = vadd.f32 0.0, %v1144
        %v1146 = vpop.f32.mrb[0].mxu0
        %v1147 = vadd.f32 0.0, %v1146
        %v1148 = vpop.f32.mrb[0].mxu0
        %v1149 = vadd.f32 0.0, %v1148
        %1150 = vmatprep.mubr.bf16.mxu0 %v1047
        %1151 = vmatmul.mubr.bf16.gmra.mrb[0].mxu0 %v1046
        %v1152 = vpop.f32.mrb[0].mxu0
        %v1153 = vadd.f32 0.0, %v1152
        %v1154 = vpop.f32.mrb[0].mxu0
        %v1155 = vadd.f32 0.0, %v1154
        %v1156 = vpop.f32.mrb[0].mxu0
        %v1157 = vadd.f32 0.0, %v1156
        %v1158 = vpop.f32.mrb[0].mxu0
        %v1159 = vadd.f32 0.0, %v1158
        %1160 = vdwg.mxu0
        %v1162 = vlaneseq
        %v1163 = vshrl.u32 %v1162, 7
        %v1164 = vsub.s32 0, %v1163
        %v1165 = vrot.slane %v331, %v1164
        %v1166 = vlaneseq
        %v1167 = vshrl.u32 %v1166, 7
        %v1168 = vsub.s32 1, %v1167
        %v1169 = vrot.slane %v331, %v1168
        %v1172 = vmul.f32 %v1083, %v1165
        %v1173 = vmul.f32 %v1085, %v1169
        %v1174 = vmul.f32 %v1087, %v1165
        %v1175 = vmul.f32 %v1089, %v1169
        %v1176 = vmul.f32 %v1093, %v1165
        %v1177 = vmul.f32 %v1095, %v1169
        %v1178 = vmul.f32 %v1097, %v1165
        %v1179 = vmul.f32 %v1099, %v1169
        %v1180 = vmul.f32 %v1103, %v1165
        %v1181 = vmul.f32 %v1105, %v1169
        %v1182 = vmul.f32 %v1107, %v1165
        %v1183 = vmul.f32 %v1109, %v1169
        %v1184 = vmul.f32 %v1113, %v1165
        %v1185 = vmul.f32 %v1115, %v1169
        %v1186 = vmul.f32 %v1117, %v1165
        %v1187 = vmul.f32 %v1119, %v1169
        %v1188 = vmul.f32 %v1123, %v1165
        %v1189 = vmul.f32 %v1125, %v1169
        %v1190 = vmul.f32 %v1127, %v1165
        %v1191 = vmul.f32 %v1129, %v1169
        %v1192 = vmul.f32 %v1133, %v1165
        %v1193 = vmul.f32 %v1135, %v1169
        %v1194 = vmul.f32 %v1137, %v1165
        %v1195 = vmul.f32 %v1139, %v1169
        %v1196 = vmul.f32 %v1143, %v1165
        %v1197 = vmul.f32 %v1145, %v1169
        %v1198 = vmul.f32 %v1147, %v1165
        %v1199 = vmul.f32 %v1149, %v1169
        %v1200 = vmul.f32 %v1153, %v1165
        %v1201 = vmul.f32 %v1155, %v1169
        %v1202 = vmul.f32 %v1157, %v1165
        %v1203 = vmul.f32 %v1159, %v1169
        %v1204 = vadd.f32 %v1172, %v417
        %v1205 = vadd.f32 %v1173, %v421
        %v1206 = vadd.f32 %v1174, %v417
        %v1207 = vadd.f32 %v1175, %v421
        %v1208 = vadd.f32 %v1176, %v417
        %v1209 = vadd.f32 %v1177, %v421
        %v1210 = vadd.f32 %v1178, %v417
        %v1211 = vadd.f32 %v1179, %v421
        %v1212 = vadd.f32 %v1180, %v417
        %v1213 = vadd.f32 %v1181, %v421
        %v1214 = vadd.f32 %v1182, %v417
        %v1215 = vadd.f32 %v1183, %v421
        %v1216 = vadd.f32 %v1184, %v417
        %v1217 = vadd.f32 %v1185, %v421
        %v1218 = vadd.f32 %v1186, %v417
        %v1219 = vadd.f32 %v1187, %v421
        %v1220 = vadd.f32 %v1188, %v417
        %v1221 = vadd.f32 %v1189, %v421
        %v1222 = vadd.f32 %v1190, %v417
        %v1223 = vadd.f32 %v1191, %v421
        %v1224 = vadd.f32 %v1192, %v417
        %v1225 = vadd.f32 %v1193, %v421
        %v1226 = vadd.f32 %v1194, %v417
        %v1227 = vadd.f32 %v1195, %v421
        %v1228 = vadd.f32 %v1196, %v417
        %v1229 = vadd.f32 %v1197, %v421
        %v1230 = vadd.f32 %v1198, %v417
        %v1231 = vadd.f32 %v1199, %v421
        %v1232 = vadd.f32 %v1200, %v417
        %v1233 = vadd.f32 %v1201, %v421
        %v1234 = vadd.f32 %v1202, %v417
        %v1235 = vadd.f32 %v1203, %v421
        %1236 = vst [vmem:[%s325] sm:$0xff] %v1204
        %1237 = vst [vmem:[%s325 + $0x8] sm:$0xff] %v1205
        %1238 = vst [vmem:[%s325 + $0x10] sm:$0xff] %v1206
        %1239 = vst [vmem:[%s325 + $0x18] sm:$0xff] %v1207
        %1240 = vst [vmem:[%s325 + $0x20] sm:$0xff] %v1208
        %1241 = vst [vmem:[%s325 + $0x28] sm:$0xff] %v1209
        %1242 = vst [vmem:[%s325 + $0x30] sm:$0xff] %v1210
        %1243 = vst [vmem:[%s325 + $0x38] sm:$0xff] %v1211
        %1244 = vst [vmem:[%s325 + $0x40] sm:$0xff] %v1212
        %1245 = vst [vmem:[%s325 + $0x48] sm:$0xff] %v1213
        %1246 = vst [vmem:[%s325 + $0x50] sm:$0xff] %v1214
        %1247 = vst [vmem:[%s325 + $0x58] sm:$0xff] %v1215
        %1248 = vst [vmem:[%s325 + $0x60] sm:$0xff] %v1216
        %1249 = vst [vmem:[%s325 + $0x68] sm:$0xff] %v1217
        %1250 = vst [vmem:[%s325 + $0x70] sm:$0xff] %v1218
        %1251 = vst [vmem:[%s325 + $0x78] sm:$0xff] %v1219
        %1252 = vst [vmem:[%s325 + $0x80] sm:$0xff] %v1220
        %1253 = vst [vmem:[%s325 + $0x88] sm:$0xff] %v1221
        %1254 = vst [vmem:[%s325 + $0x90] sm:$0xff] %v1222
        %1255 = vst [vmem:[%s325 + $0x98] sm:$0xff] %v1223
        %1256 = vst [vmem:[%s325 + $0xa0] sm:$0xff] %v1224
        %1257 = vst [vmem:[%s325 + $0xa8] sm:$0xff] %v1225
        %1258 = vst [vmem:[%s325 + $0xb0] sm:$0xff] %v1226
        %1259 = vst [vmem:[%s325 + $0xb8] sm:$0xff] %v1227
        %1260 = vst [vmem:[%s325 + $0xc0] sm:$0xff] %v1228
        %1261 = vst [vmem:[%s325 + $0xc8] sm:$0xff] %v1229
        %1262 = vst [vmem:[%s325 + $0xd0] sm:$0xff] %v1230
        %1263 = vst [vmem:[%s325 + $0xd8] sm:$0xff] %v1231
        %1264 = vst [vmem:[%s325 + $0xe0] sm:$0xff] %v1232
        %1265 = vst [vmem:[%s325 + $0xe8] sm:$0xff] %v1233
        %1266 = vst [vmem:[%s325 + $0xf0] sm:$0xff] %v1234
        %1267 = vst [vmem:[%s325 + $0xf8] sm:$0xff] %v1235
        %s1268 = sand.u32 %s170, 1
        %s1269 = scalar_lea.sflag [#allocation4], %s1268
        %s1270 = sand.u32 %s170, 1
        %s1271 = smul.addr %s1270, 256
        %s1272 = scalar_lea.vmem [#allocation8], %s1271
        // Predicated region
        $region57: #{tpu_custom_call.1} parent=43 // pred_check
          %p1273 = pneg %p180
        $region58: #{tpu_custom_call.1} parent=43 // pred_check_branch
          %1275 = sbr.rel (%p1273) target = $region60
        $region59: #{tpu_custom_call.1} parent=43 // pred_region
          %s1276 = smul.u32 16, %s26
          %s1278 = ssub.s32 4096, 4096
          %1279 = vsyncadd %s1269, %s1278
          %s1280 = smul.addr %s1276, 2
          %s1281 = smul.addr %s1280, 128
          %s1282 = scalar_lea.hbm %s6, %s1281
          %s1283 = sshll.u32 %s1272, 4
          %s1284 = int_to_ptr.vmem [resolvable:$true] %s1283
          %1289 = dma.vmem_to_hbm [thread:$0]  %s1284, 4096, %s1282, %s1269, 256, 256, 16
        $region60: #{tpu_custom_call.1} parent=43 // pred_fallthru
          _
      $region44: #{tpu_custom_call.1} parent=5 // pred_fallthru
        _
      %p1290 = scmp.le.s32.totalorder 2, %s21
      // Predicated region
      $region61: #{tpu_custom_call.1} parent=5 // pred_check
        %p1291 = pneg %p1290
      $region62: #{tpu_custom_call.1} parent=5 // pred_check_branch
        %1293 = sbr.rel (%p1291) target = $region64
      $region63: #{tpu_custom_call.1} parent=5 // pred_region
        %s1294 = ssub.s32 %s21, 2
        // Predicated region
        $region65: #{tpu_custom_call.1} parent=63 // pred_check
          %p1295 = pneg %p186
        $region66: #{tpu_custom_call.1} parent=63 // pred_check_branch
          %1297 = sbr.rel (%p1295) target = $region68
        $region67: #{tpu_custom_call.1} parent=63 // pred_region
          %s1298 = sand.u32 %s171, 1
          %s1299 = scalar_lea.sflag [#allocation4], %s1298
          %s1300 = sand.u32 %s171, 1
          %s1301 = smul.addr %s1300, 256
          %s1302 = scalar_lea.vmem [#allocation8], %s1301
          %1303 = dma.done %s1299, 4096
        $region68: #{tpu_custom_call.1} parent=63 // pred_fallthru
          _
      $region64: #{tpu_custom_call.1} parent=5 // pred_fallthru
        _
    $region6: #{tpu_custom_call.1} parent=1 // loop_footer
      %s25 = sadd.s32 1, %s21
    $region7: #{tpu_custom_call.1} parent=1 // loop_footer_branch
      %20 = sbr.rel target = $region3
    $region8: #{tpu_custom_call.1} parent=1 // loop_exit
      _
    %1304 = vsyncpa [#allocation3], 1
    %s1305 = scalar_lea.sflag [#allocation3], 1
    %1306 = vsyncpa %s1305, 1
    %1307 = vsyncpa [#allocation6], 1
    %s1308 = scalar_lea.sflag [#allocation6], 1
    %1309 = vsyncpa %s1308, 1
    %1310 = vsyncpa [#allocation4], 1
    %s1311 = scalar_lea.sflag [#allocation4], 1
    %1312 = vsyncpa %s1311, 1

// kernel: tpu_custom_call.1
$region0: #{tpu_custom_call.1}
  #allocation0 [shape = 'u32[]', space=smem, size = 0x4, offset = 0x4, fixed_abs, tag = 'smem constant byte address 0x4 - core index']
  #allocation1 [shape = 'u32[144,128]{1,0:T(1,128)}', space=vmem, size = 0x12000, scoped, tag = 'internal scratch']
  %s0 = inlined_call_operand.hbm [shape: bf16[256,256], index: 0, kind: input, shape index: {}]
  %s1 = inlined_call_operand.hbm [shape: bf16[256,256], index: 1, kind: input, shape index: {}]
  %s2 = inlined_call_operand.hbm [shape: bf16[256,256], index: 2, kind: input, shape index: {}]
  %s3 = inlined_call_operand.vmem [shape: f32[1,256], index: 3, kind: input, shape index: {}]
  %s4 = inlined_call_operand.vmem [shape: f32[1,256], index: 4, kind: input, shape index: {}]
  %s5 = inlined_call_operand.vmem [shape: f32[1,256], index: 5, kind: input, shape index: {}]
  %s6 = inlined_call_operand.hbm [shape: f32[256,256], index: 6, kind: output, shape index: {}]
  %s7 = sld [smem:[#allocation0]]
  $region69: #{tpu_custom_call.1} parent=0
    _
  %s9 = ssub.s32 1, %s7
  %s10 = scalar_select 0, %s9, %s7
  $region1: #{tpu_custom_call.1} parent=0
    #allocation2 [shape = 'u8[131072]{0}', space=vmem, size = 0x20000, scoped, tag = 'input window, operand 0']
    #allocation3 [shape = 's32[2]{0}', space=sflag, size = 0x8, scoped, tag = 'scoped memory for tpu_custom_call.1']
    #allocation4 [shape = 's32[2]{0}', space=sflag, size = 0x8, scoped, tag = 'scoped memory for tpu_custom_call.1']
    #allocation5 [shape = 'u8[131072]{0}', space=vmem, size = 0x20000, scoped, tag = 'input window, operand 1']
    #allocation6 [shape = 's32[2]{0}', space=sflag, size = 0x8, scoped, tag = 'scoped memory for tpu_custom_call.1']
    #allocation7 [shape = 'u8[131072]{0}', space=vmem, size = 0x20000, scoped, tag = 'input window, operand 2, single buffered']
    #allocation8 [shape = 'u8[262144]{0}', space=vmem, size = 0x40000, scoped, tag = 'output window, operand 0']
    %11 = vsyncpa [#allocation3], 0
    %s12 = scalar_lea.sflag [#allocation3], 1
    %13 = vsyncpa %s12, 0
    %14 = vsyncpa [#allocation6], 0
    %s15 = scalar_lea.sflag [#allocation6], 1
    %16 = vsyncpa %s15, 0
    %17 = vsyncpa [#allocation4], 0
    %s18 = scalar_lea.sflag [#allocation4], 1
    %19 = vsyncpa %s18, 0
    loop: start=0, step=1, limit=4
    $region2: #{tpu_custom_call.1} parent=1 // loop_pre_header
      _
    $region3: #{tpu_custom_call.1} parent=1 // loop_header
      %s21 = sphi 0, %s25
      %p22 = scmp.ge.s32.totalorder %s21, 4
      %s31 = sphi 0, %s33
      %s34 = sphi 0, %s31
      %s35 = sphi 0, %s34
      %s51 = sphi 0, %s35
      %s57 = sphi 0, %s59
      %s60 = sphi 0, %s57
      %s61 = sphi 0, %s60
      %s77 = sphi 0, %s61
      %s81 = sphi 0, %s81
      %s83 = sphi 0, %s81
      %s84 = sphi 0, %s83
      %s98 = sphi 0, %s84
      %s102 = sphi 0, %s102
      %s104 = sphi 0, %s102
      %s105 = sphi 0, %s104
      %s119 = sphi 0, %s105
      %s123 = sphi 0, %s123
      %s125 = sphi 0, %s123
      %s126 = sphi 0, %s125
      %s140 = sphi 0, %s126
      %s144 = sphi 0, %s144
      %s146 = sphi 0, %s144
      %s147 = sphi 0, %s146
      %s161 = sphi 0, %s147
      %s167 = sphi 0, %s169
      %s170 = sphi 0, %s167
      %s171 = sphi 0, %s170
      %s187 = sphi 0, %s171
    $region4: #{tpu_custom_call.1} parent=1 // loop_header_branch
      %24 = sbr.rel (%p22) target = $region8
    $region5: #{tpu_custom_call.1} parent=1 // loop_body
      %s26 = ssub.s32 %s21, 1
      %s27 = ssub.s32 %s21, 2
      %s28 = sadd.s32 %s21, 1
      %s29 = ssub.s32 %s21, %s28
      %p30 = scmp.eq.s32.totalorder %s29, 0
      %s32 = sadd.s32 %s31, 1
      %s33 = scalar_select %p30, %s31, %s32
      %p36 = pneg %p30
      %p37 = scmp.eq.s32.totalorder %s21, 1
      %p38 = por %p36, %p37
      %p39 = scmp.ne.s32.totalorder %s31, %s34
      %p40 = scmp.eq.s32.totalorder %s21, 0
      %p41 = por %p39, %p40
      %p42 = scmp.ne.s32.totalorder %s31, %s34
      %p43 = scmp.eq.s32.totalorder %s26, 1
      %p44 = por %p42, %p43
      %p45 = scmp.ne.s32.totalorder %s34, %s35
      %p46 = scmp.eq.s32.totalorder %s26, 0
      %p47 = por %p45, %p46
      %p48 = scmp.ne.s32.totalorder %s34, %s35
      %p49 = scmp.eq.s32.totalorder %s27, 1
      %p50 = por %p48, %p49
      %p52 = scmp.ne.s32.totalorder %s35, %s51
      %p53 = scmp.eq.s32.totalorder %s27, 0
      %p54 = por %p52, %p53
      %s55 = ssub.s32 %s21, %s28
      %p56 = scmp.eq.s32.totalorder %s55, 0
      %s58 = sadd.s32 %s57, 1
      %s59 = scalar_select %p56, %s57, %s58
      %p62 = pneg %p56
      %p63 = scmp.eq.s32.totalorder %s21, 1
      %p64 = por %p62, %p63
      %p65 = scmp.ne.s32.totalorder %s57, %s60
      %p66 = scmp.eq.s32.totalorder %s21, 0
      %p67 = por %p65, %p66
      %p68 = scmp.ne.s32.totalorder %s57, %s60
      %p69 = scmp.eq.s32.totalorder %s26, 1
      %p70 = por %p68, %p69
      %p71 = scmp.ne.s32.totalorder %s60, %s61
      %p72 = scmp.eq.s32.totalorder %s26, 0
      %p73 = por %p71, %p72
      %p74 = scmp.ne.s32.totalorder %s60, %s61
      %p75 = scmp.eq.s32.totalorder %s27, 1
      %p76 = por %p74, %p75
      %p78 = scmp.ne.s32.totalorder %s61, %s77
      %p79 = scmp.eq.s32.totalorder %s27, 0
      %p80 = por %p78, %p79
      %s82 = sadd.s32 %s81, 1
      %p85 = scmp.eq.s32.totalorder %s21, 1
      %p86 = scmp.ne.s32.totalorder %s81, %s83
      %p87 = scmp.eq.s32.totalorder %s21, 0
      %p88 = por %p86, %p87
      %p89 = scmp.ne.s32.totalorder %s81, %s83
      %p90 = scmp.eq.s32.totalorder %s26, 1
      %p91 = por %p89, %p90
      %p92 = scmp.ne.s32.totalorder %s83, %s84
      %p93 = scmp.eq.s32.totalorder %s26, 0
      %p94 = por %p92, %p93
      %p95 = scmp.ne.s32.totalorder %s83, %s84
      %p96 = scmp.eq.s32.totalorder %s27, 1
      %p97 = por %p95, %p96
      %p99 = scmp.ne.s32.totalorder %s84, %s98
      %p100 = scmp.eq.s32.totalorder %s27, 0
      %p101 = por %p99, %p100
      %s103 = sadd.s32 %s102, 1
      %p106 = scmp.eq.s32.totalorder %s21, 1
      %p107 = scmp.ne.s32.totalorder %s102, %s104
      %p108 = scmp.eq.s32.totalorder %s21, 0
      %p109 = por %p107, %p108
      %p110 = scmp.ne.s32.totalorder %s102, %s104
      %p111 = scmp.eq.s32.totalorder %s26, 1
      %p112 = por %p110, %p111
      %p113 = scmp.ne.s32.totalorder %s104, %s105
      %p114 = scmp.eq.s32.totalorder %s26, 0
      %p115 = por %p113, %p114
      %p116 = scmp.ne.s32.totalorder %s104, %s105
      %p117 = scmp.eq.s32.totalorder %s27, 1
      %p118 = por %p116, %p117
      %p120 = scmp.ne.s32.totalorder %s105, %s119
      %p121 = scmp.eq.s32.totalorder %s27, 0
      %p122 = por %p120, %p121
      %s124 = sadd.s32 %s123, 1
      %p127 = scmp.eq.s32.totalorder %s21, 1
      %p128 = scmp.ne.s32.totalorder %s123, %s125
      %p129 = scmp.eq.s32.totalorder %s21, 0
      %p130 = por %p128, %p129
      %p131 = scmp.ne.s32.totalorder %s123, %s125
      %p132 = scmp.eq.s32.totalorder %s26, 1
      %p133 = por %p131, %p132
      %p134 = scmp.ne.s32.totalorder %s125, %s126
      %p135 = scmp.eq.s32.totalorder %s26, 0
      %p136 = por %p134, %p135
      %p137 = scmp.ne.s32.totalorder %s125, %s126
      %p138 = scmp.eq.s32.totalorder %s27, 1
      %p139 = por %p137, %p138
      %p141 = scmp.ne.s32.totalorder %s126, %s140
      %p142 = scmp.eq.s32.totalorder %s27, 0
      %p143 = por %p141, %p142
      %s145 = sadd.s32 %s144, 1
      %p148 = scmp.eq.s32.totalorder %s21, 1
      %p149 = scmp.ne.s32.totalorder %s144, %s146
      %p150 = scmp.eq.s32.totalorder %s21, 0
      %p151 = por %p149, %p150
      %p152 = scmp.ne.s32.totalorder %s144, %s146
      %p153 = scmp.eq.s32.totalorder %s26, 1
      %p154 = por %p152, %p153
      %p155 = scmp.ne.s32.totalorder %s146, %s147
      %p156 = scmp.eq.s32.totalorder %s26, 0
      %p157 = por %p155, %p156
      %p158 = scmp.ne.s32.totalorder %s146, %s147
      %p159 = scmp.eq.s32.totalorder %s27, 1
      %p160 = por %p158, %p159
      %p162 = scmp.ne.s32.totalorder %s147, %s161
      %p163 = scmp.eq.s32.totalorder %s27, 0
      %p164 = por %p162, %p163
      %s165 = ssub.s32 %s21, %s28
      %p166 = scmp.eq.s32.totalorder %s165, 0
      %s168 = sadd.s32 %s167, 1
      %s169 = scalar_select %p166, %s167, %s168
      %p172 = pneg %p166
      %p173 = scmp.eq.s32.totalorder %s21, 1
      %p174 = por %p172, %p173
      %p175 = scmp.ne.s32.totalorder %s167, %s170
      %p176 = scmp.eq.s32.totalorder %s21, 0
      %p177 = por %p175, %p176
      %p178 = scmp.ne.s32.totalorder %s167, %s170
      %p179 = scmp.eq.s32.totalorder %s26, 1
      %p180 = por %p178, %p179
      %p181 = scmp.ne.s32.totalorder %s170, %s171
      %p182 = scmp.eq.s32.totalorder %s26, 0
      %p183 = por %p181, %p182
      %p184 = scmp.ne.s32.totalorder %s170, %s171
      %p185 = scmp.eq.s32.totalorder %s27, 1
      %p186 = por %p184, %p185
      %p188 = scmp.ne.s32.totalorder %s171, %s187
      %p189 = scmp.eq.s32.totalorder %s27, 0
      %p190 = por %p188, %p189
      %p191 = scmp.le.s32.totalorder 1, %s21
      %p192 = scmp.lt.s32.totalorder %s21, 3
      %p193 = pnand %p191, %p192
      %p194 = pneg %p193
      // Predicated region
      $region9: #{tpu_custom_call.1} parent=5 // pred_check
        _
      $region10: #{tpu_custom_call.1} parent=5 // pred_check_branch
        %196 = sbr.rel (%p193) target = $region12
      $region11: #{tpu_custom_call.1} parent=5 // pred_region
        %s197 = ssub.s32 %s21, 1
        // Predicated region
        $region13: #{tpu_custom_call.1} parent=11 // pred_check
          %p198 = pneg %p94
        $region14: #{tpu_custom_call.1} parent=11 // pred_check_branch
          %200 = sbr.rel (%p198) target = $region16
        $region15: #{tpu_custom_call.1} parent=11 // pred_region
          %s202 = ssub.s32 4096, 4096
          %203 = vsyncadd [#allocation6], %s202
          %s204 = sshll.u32 [#allocation7], 4
          %s205 = int_to_ptr.vmem [resolvable:$true] %s204
          %210 = dma.hbm_to_vmem [thread:$0]  %s2, 4096, %s205, [#allocation6], 128, 128, 8
        $region16: #{tpu_custom_call.1} parent=11 // pred_fallthru
          _
        // Predicated region
        $region17: #{tpu_custom_call.1} parent=11 // pred_check
          %p211 = pneg %p115
        $region18: #{tpu_custom_call.1} parent=11 // pred_check_branch
          %213 = sbr.rel (%p211) target = $region20
        $region19: #{tpu_custom_call.1} parent=11 // pred_region
          _
        $region20: #{tpu_custom_call.1} parent=11 // pred_fallthru
          _
        // Predicated region
        $region21: #{tpu_custom_call.1} parent=11 // pred_check
          %p214 = pneg %p136
        $region22: #{tpu_custom_call.1} parent=11 // pred_check_branch
          %216 = sbr.rel (%p214) target = $region24
        $region23: #{tpu_custom_call.1} parent=11 // pred_region
          _
        $region24: #{tpu_custom_call.1} parent=11 // pred_fallthru
          _
        // Predicated region
        $region25: #{tpu_custom_call.1} parent=11 // pred_check
          %p217 = pneg %p157
        $region26: #{tpu_custom_call.1} parent=11 // pred_check_branch
          %219 = sbr.rel (%p217) target = $region28
        $region27: #{tpu_custom_call.1} parent=11 // pred_region
          _
        $region28: #{tpu_custom_call.1} parent=11 // pred_fallthru
          _
      $region12: #{tpu_custom_call.1} parent=5 // pred_fallthru
        _
      %p220 = scmp.lt.s32.totalorder %s21, 2
      // Predicated region
      $region29: #{tpu_custom_call.1} parent=5 // pred_check
        %p221 = pneg %p220
      $region30: #{tpu_custom_call.1} parent=5 // pred_check_branch
        %223 = sbr.rel (%p221) target = $region32
      $region31: #{tpu_custom_call.1} parent=5 // pred_region
        // Predicated region
        $region33: #{tpu_custom_call.1} parent=31 // pred_check
          %p224 = pneg %p41
        $region34: #{tpu_custom_call.1} parent=31 // pred_check_branch
          %226 = sbr.rel (%p224) target = $region36
        $region35: #{tpu_custom_call.1} parent=31 // pred_region
          %s227 = sand.u32 %s31, 1
          %s228 = scalar_lea.sflag [#allocation3], %s227
          %s229 = sand.u32 %s31, 1
          %s230 = smul.addr %s229, 128
          %s231 = scalar_lea.vmem [#allocation2], %s230
          %s232 = smul.u32 16, %s21
          %s234 = ssub.s32 2048, 2048
          %235 = vsyncadd %s228, %s234
          %s236 = smul.addr %s232, 2
          %s237 = smul.addr %s236, 64
          %s238 = scalar_lea.hbm %s0, %s237
          %s239 = sshll.u32 %s231, 4
          %s240 = int_to_ptr.vmem [resolvable:$true] %s239
          %245 = dma.hbm_to_vmem [thread:$0]  %s238, 2048, %s240, %s228, 128, 128, 8
        $region36: #{tpu_custom_call.1} parent=31 // pred_fallthru
          _
        // Predicated region
        $region37: #{tpu_custom_call.1} parent=31 // pred_check
          %p246 = pneg %p67
        $region38: #{tpu_custom_call.1} parent=31 // pred_check_branch
          %248 = sbr.rel (%p246) target = $region40
        $region39: #{tpu_custom_call.1} parent=31 // pred_region
          %s249 = sand.u32 %s21, 1
          %s250 = scalar_lea.sflag [#allocation6], %s249
          %s251 = sand.u32 %s57, 1
          %s252 = smul.addr %s251, 128
          %s253 = scalar_lea.vmem [#allocation5], %s252
          %s254 = smul.u32 16, %s21
          %s256 = ssub.s32 2048, 2048
          %257 = vsyncadd %s250, %s256
          %s258 = smul.addr %s254, 2
          %s259 = smul.addr %s258, 64
          %s260 = scalar_lea.hbm %s1, %s259
          %s261 = sshll.u32 %s253, 4
          %s262 = int_to_ptr.vmem [resolvable:$true] %s261
          %267 = dma.hbm_to_vmem [thread:$0]  %s260, 2048, %s262, %s250, 128, 128, 8
        $region40: #{tpu_custom_call.1} parent=31 // pred_fallthru
          _
      $region32: #{tpu_custom_call.1} parent=5 // pred_fallthru
        _
      %p268 = scmp.le.s32.totalorder 1, %s21
      %p269 = scmp.lt.s32.totalorder %s21, 3
      %p270 = pnand %p268, %p269
      %p271 = pneg %p270
      // Predicated region
      $region41: #{tpu_custom_call.1} parent=5 // pred_check
        _
      $region42: #{tpu_custom_call.1} parent=5 // pred_check_branch
        %273 = sbr.rel (%p270) target = $region44
      $region43: #{tpu_custom_call.1} parent=5 // pred_region
        %s274 = ssub.s32 %s21, 1
        %s275 = sand.u32 %s34, 1
        %s276 = scalar_lea.sflag [#allocation3], %s275
        %s277 = sand.u32 %s34, 1
        %s278 = smul.addr %s277, 128
        %s279 = scalar_lea.vmem [#allocation2], %s278
        // Predicated region
        $region45: #{tpu_custom_call.1} parent=43 // pred_check
          %p280 = pneg %p47
        $region46: #{tpu_custom_call.1} parent=43 // pred_check_branch
          %282 = sbr.rel (%p280) target = $region48
        $region47: #{tpu_custom_call.1} parent=43 // pred_region
          %283 = dma.done %s276, 2048
        $region48: #{tpu_custom_call.1} parent=43 // pred_fallthru
          _
        %s284 = sand.u32 %s26, 1
        %s285 = scalar_lea.sflag [#allocation6], %s284
        %s286 = sand.u32 %s60, 1
        %s287 = smul.addr %s286, 128
        %s288 = scalar_lea.vmem [#allocation5], %s287
        // Predicated region
        $region49: #{tpu_custom_call.1} parent=43 // pred_check
          %p289 = pneg %p73
        $region50: #{tpu_custom_call.1} parent=43 // pred_check_branch
          %291 = sbr.rel (%p289) target = $region52
        $region51: #{tpu_custom_call.1} parent=43 // pred_region
          %292 = dma.done %s285, 2048
        $region52: #{tpu_custom_call.1} parent=43 // pred_fallthru
          _
        // Predicated region
        $region53: #{tpu_custom_call.1} parent=43 // pred_check
          %p293 = pneg %p94
        $region54: #{tpu_custom_call.1} parent=43 // pred_check_branch
          %295 = sbr.rel (%p293) target = $region56
        $region55: #{tpu_custom_call.1} parent=43 // pred_region
          %296 = dma.done [#allocation6], 4096
        $region56: #{tpu_custom_call.1} parent=43 // pred_fallthru
          _
        %s297 = sand.u32 %s34, 1
        %s298 = scalar_lea.sflag [#allocation3], %s297
        %s299 = sand.u32 %s34, 1
        %s300 = smul.addr %s299, 128
        %s301 = scalar_lea.vmem [#allocation2], %s300
        %p302 = pneg %p47
        %p303 = pneg %p44
        %s304 = sand.u32 %s26, 1
        %s305 = scalar_lea.sflag [#allocation6], %s304
        %s306 = sand.u32 %s60, 1
        %s307 = smul.addr %s306, 128
        %s308 = scalar_lea.vmem [#allocation5], %s307
        %p309 = pneg %p73
        %p310 = pneg %p70
        %p311 = pneg %p94
        %p312 = pneg %p91
        %p313 = pneg %p115
        %p314 = pneg %p112
        %p315 = pneg %p136
        %p316 = pneg %p133
        %p317 = pneg %p157
        %p318 = pneg %p154
        %p319 = pneg %p183
        %p320 = pneg %p180
        %s321 = sand.u32 %s170, 1
        %s322 = scalar_lea.sflag [#allocation4], %s321
        %s323 = sand.u32 %s170, 1
        %s324 = smul.addr %s323, 256
        %s325 = scalar_lea.vmem [#allocation8], %s324
        %s326 = smul.u32 16, %s26
        %s327 = smul.u32 16, %s26
        %s328 = smul.u32 16, %s26
        %v330 = vld [vmem:[%s3] sm:$0x3]
        %v331 = vld [vmem:[%s4] sm:$0x3]
        %v332 = vld [vmem:[%s5] sm:$0x3]
        %v333 = vld [vmem:[#allocation7] sm:$0xff]
        %v334 = vld [vmem:[#allocation7 + $0x8] sm:$0xff]
        %v335 = vld [vmem:[#allocation7 + $0x10] sm:$0xff]
        %v336 = vld [vmem:[#allocation7 + $0x18] sm:$0xff]
        %v337 = vld [vmem:[#allocation7 + $0x20] sm:$0xff]
        %v338 = vld [vmem:[#allocation7 + $0x28] sm:$0xff]
        %v339 = vld [vmem:[#allocation7 + $0x30] sm:$0xff]
        %v340 = vld [vmem:[#allocation7 + $0x38] sm:$0xff]
        %v341 = vld [vmem:[#allocation7 + $0x40] sm:$0xff]
        %v342 = vld [vmem:[#allocation7 + $0x48] sm:$0xff]
        %v343 = vld [vmem:[#allocation7 + $0x50] sm:$0xff]
        %v344 = vld [vmem:[#allocation7 + $0x58] sm:$0xff]
        %v345 = vld [vmem:[#allocation7 + $0x60] sm:$0xff]
        %v346 = vld [vmem:[#allocation7 + $0x68] sm:$0xff]
        %v347 = vld [vmem:[#allocation7 + $0x70] sm:$0xff]
        %v348 = vld [vmem:[#allocation7 + $0x78] sm:$0xff]
        %v349 = vld [vmem:[#allocation7 + $0x80] sm:$0xff]
        %v350 = vld [vmem:[#allocation7 + $0x88] sm:$0xff]
        %v351 = vld [vmem:[#allocation7 + $0x90] sm:$0xff]
        %v352 = vld [vmem:[#allocation7 + $0x98] sm:$0xff]
        %v353 = vld [vmem:[#allocation7 + $0xa0] sm:$0xff]
        %v354 = vld [vmem:[#allocation7 + $0xa8] sm:$0xff]
        %v355 = vld [vmem:[#allocation7 + $0xb0] sm:$0xff]
        %v356 = vld [vmem:[#allocation7 + $0xb8] sm:$0xff]
        %v357 = vld [vmem:[#allocation7 + $0xc0] sm:$0xff]
        %v358 = vld [vmem:[#allocation7 + $0xc8] sm:$0xff]
        %v359 = vld [vmem:[#allocation7 + $0xd0] sm:$0xff]
        %v360 = vld [vmem:[#allocation7 + $0xd8] sm:$0xff]
        %v361 = vld [vmem:[#allocation7 + $0xe0] sm:$0xff]
        %v362 = vld [vmem:[#allocation7 + $0xe8] sm:$0xff]
        %v363 = vld [vmem:[#allocation7 + $0xf0] sm:$0xff]
        %v364 = vld [vmem:[#allocation7 + $0xf8] sm:$0xff]
        %v365 = vld [vmem:[%s279] sm:$0xff]
        %v366 = vld [vmem:[%s279 + $0x8] sm:$0xff]
        %v367 = vld [vmem:[%s279 + $0x10] sm:$0xff]
        %v368 = vld [vmem:[%s279 + $0x18] sm:$0xff]
        %v369 = vld [vmem:[%s279 + $0x20] sm:$0xff]
        %v370 = vld [vmem:[%s279 + $0x28] sm:$0xff]
        %v371 = vld [vmem:[%s279 + $0x30] sm:$0xff]
        %v372 = vld [vmem:[%s279 + $0x38] sm:$0xff]
        %v373 = vld [vmem:[%s279 + $0x40] sm:$0xff]
        %v374 = vld [vmem:[%s279 + $0x48] sm:$0xff]
        %v375 = vld [vmem:[%s279 + $0x50] sm:$0xff]
        %v376 = vld [vmem:[%s279 + $0x58] sm:$0xff]
        %v377 = vld [vmem:[%s279 + $0x60] sm:$0xff]
        %v378 = vld [vmem:[%s279 + $0x68] sm:$0xff]
        %v379 = vld [vmem:[%s279 + $0x70] sm:$0xff]
        %v380 = vld [vmem:[%s279 + $0x78] sm:$0xff]
        %v381 = vunpack.c.l.bf16 %v365
        %v382 = vunpack.c.h.bf16 %v365
        %v383 = vunpack.c.l.bf16 %v366
        %v384 = vunpack.c.h.bf16 %v366
        %v385 = vunpack.c.l.bf16 %v367
        %v386 = vunpack.c.h.bf16 %v367
        %v387 = vunpack.c.l.bf16 %v368
        %v388 = vunpack.c.h.bf16 %v368
        %v389 = vunpack.c.l.bf16 %v369
        %v390 = vunpack.c.h.bf16 %v369
        %v391 = vunpack.c.l.bf16 %v370
        %v392 = vunpack.c.h.bf16 %v370
        %v393 = vunpack.c.l.bf16 %v371
        %v394 = vunpack.c.h.bf16 %v371
        %v395 = vunpack.c.l.bf16 %v372
        %v396 = vunpack.c.h.bf16 %v372
        %v397 = vunpack.c.l.bf16 %v373
        %v398 = vunpack.c.h.bf16 %v373
        %v399 = vunpack.c.l.bf16 %v374
        %v400 = vunpack.c.h.bf16 %v374
        %v401 = vunpack.c.l.bf16 %v375
        %v402 = vunpack.c.h.bf16 %v375
        %v403 = vunpack.c.l.bf16 %v376
        %v404 = vunpack.c.h.bf16 %v376
        %v405 = vunpack.c.l.bf16 %v377
        %v406 = vunpack.c.h.bf16 %v377
        %v407 = vunpack.c.l.bf16 %v378
        %v408 = vunpack.c.h.bf16 %v378
        %v409 = vunpack.c.l.bf16 %v379
        %v410 = vunpack.c.h.bf16 %v379
        %v411 = vunpack.c.l.bf16 %v380
        %v412 = vunpack.c.h.bf16 %v380
        %v414 = vlaneseq
        %v415 = vshrl.u32 %v414, 7
        %v416 = vsub.s32 0, %v415
        %v417 = vrot.slane %v330, %v416
        %v418 = vlaneseq
        %v419 = vshrl.u32 %v418, 7
        %v420 = vsub.s32 1, %v419
        %v421 = vrot.slane %v330, %v420
        %v424 = vsub.f32 %v381, %v417
        %v425 = vsub.f32 %v382, %v421
        %v426 = vsub.f32 %v383, %v417
        %v427 = vsub.f32 %v384, %v421
        %v428 = vsub.f32 %v385, %v417
        %v429 = vsub.f32 %v386, %v421
        %v430 = vsub.f32 %v387, %v417
        %v431 = vsub.f32 %v388, %v421
        %v432 = vsub.f32 %v389, %v417
        %v433 = vsub.f32 %v390, %v421
        %v434 = vsub.f32 %v391, %v417
        %v435 = vsub.f32 %v392, %v421
        %v436 = vsub.f32 %v393, %v417
        %v437 = vsub.f32 %v394, %v421
        %v438 = vsub.f32 %v395, %v417
        %v439 = vsub.f32 %v396, %v421
        %v440 = vsub.f32 %v397, %v417
        %v441 = vsub.f32 %v398, %v421
        %v442 = vsub.f32 %v399, %v417
        %v443 = vsub.f32 %v400, %v421
        %v444 = vsub.f32 %v401, %v417
        %v445 = vsub.f32 %v402, %v421
        %v446 = vsub.f32 %v403, %v417
        %v447 = vsub.f32 %v404, %v421
        %v448 = vsub.f32 %v405, %v417
        %v449 = vsub.f32 %v406, %v421
        %v450 = vsub.f32 %v407, %v417
        %v451 = vsub.f32 %v408, %v421
        %v452 = vsub.f32 %v409, %v417
        %v453 = vsub.f32 %v410, %v421
        %v454 = vsub.f32 %v411, %v417
        %v455 = vsub.f32 %v412, %v421
        %v457 = vlaneseq
        %v458 = vshrl.u32 %v457, 7
        %v459 = vsub.s32 0, %v458
        %v460 = vrot.slane %v332, %v459
        %v461 = vlaneseq
        %v462 = vshrl.u32 %v461, 7
        %v463 = vsub.s32 1, %v462
        %v464 = vrot.slane %v332, %v463
        %v467 = vmul.f32 %v424, %v460
        %v468 = vmul.f32 %v425, %v464
        %v469 = vmul.f32 %v426, %v460
        %v470 = vmul.f32 %v427, %v464
        %v471 = vmul.f32 %v428, %v460
        %v472 = vmul.f32 %v429, %v464
        %v473 = vmul.f32 %v430, %v460
        %v474 = vmul.f32 %v431, %v464
        %v475 = vmul.f32 %v432, %v460
        %v476 = vmul.f32 %v433, %v464
        %v477 = vmul.f32 %v434, %v460
        %v478 = vmul.f32 %v435, %v464
        %v479 = vmul.f32 %v436, %v460
        %v480 = vmul.f32 %v437, %v464
        %v481 = vmul.f32 %v438, %v460
        %v482 = vmul.f32 %v439, %v464
        %v483 = vmul.f32 %v440, %v460
        %v484 = vmul.f32 %v441, %v464
        %v485 = vmul.f32 %v442, %v460
        %v486 = vmul.f32 %v443, %v464
        %v487 = vmul.f32 %v444, %v460
        %v488 = vmul.f32 %v445, %v464
        %v489 = vmul.f32 %v446, %v460
        %v490 = vmul.f32 %v447, %v464
        %v491 = vmul.f32 %v448, %v460
        %v492 = vmul.f32 %v449, %v464
        %v493 = vmul.f32 %v450, %v460
        %v494 = vmul.f32 %v451, %v464
        %v495 = vmul.f32 %v452, %v460
        %v496 = vmul.f32 %v453, %v464
        %v497 = vmul.f32 %v454, %v460
        %v498 = vmul.f32 %v455, %v464
        %v499 = vpack.c.bf16 %v469, %v467
        %v500 = vpack.c.bf16 %v470, %v468
        %v501 = vpack.c.bf16 %v473, %v471
        %v502 = vpack.c.bf16 %v474, %v472
        %v503 = vpack.c.bf16 %v477, %v475
        %v504 = vpack.c.bf16 %v478, %v476
        %v505 = vpack.c.bf16 %v481, %v479
        %v506 = vpack.c.bf16 %v482, %v480
        %v507 = vpack.c.bf16 %v485, %v483
        %v508 = vpack.c.bf16 %v486, %v484
        %v509 = vpack.c.bf16 %v489, %v487
        %v510 = vpack.c.bf16 %v490, %v488
        %v511 = vpack.c.bf16 %v493, %v491
        %v512 = vpack.c.bf16 %v494, %v492
        %v513 = vpack.c.bf16 %v497, %v495
        %v514 = vpack.c.bf16 %v498, %v496
        %v515 = vld [vmem:[%s288] sm:$0xff]
        %v516 = vld [vmem:[%s288 + $0x8] sm:$0xff]
        %v517 = vld [vmem:[%s288 + $0x10] sm:$0xff]
        %v518 = vld [vmem:[%s288 + $0x18] sm:$0xff]
        %v519 = vld [vmem:[%s288 + $0x20] sm:$0xff]
        %v520 = vld [vmem:[%s288 + $0x28] sm:$0xff]
        %v521 = vld [vmem:[%s288 + $0x30] sm:$0xff]
        %v522 = vld [vmem:[%s288 + $0x38] sm:$0xff]
        %v523 = vld [vmem:[%s288 + $0x40] sm:$0xff]
        %v524 = vld [vmem:[%s288 + $0x48] sm:$0xff]
        %v525 = vld [vmem:[%s288 + $0x50] sm:$0xff]
        %v526 = vld [vmem:[%s288 + $0x58] sm:$0xff]
        %v527 = vld [vmem:[%s288 + $0x60] sm:$0xff]
        %v528 = vld [vmem:[%s288 + $0x68] sm:$0xff]
        %v529 = vld [vmem:[%s288 + $0x70] sm:$0xff]
        %v530 = vld [vmem:[%s288 + $0x78] sm:$0xff]
        %v531 = vunpack.c.l.bf16 %v515
        %v532 = vunpack.c.h.bf16 %v515
        %v533 = vunpack.c.l.bf16 %v516
        %v534 = vunpack.c.h.bf16 %v516
        %v535 = vunpack.c.l.bf16 %v517
        %v536 = vunpack.c.h.bf16 %v517
        %v537 = vunpack.c.l.bf16 %v518
        %v538 = vunpack.c.h.bf16 %v518
        %v539 = vunpack.c.l.bf16 %v519
        %v540 = vunpack.c.h.bf16 %v519
        %v541 = vunpack.c.l.bf16 %v520
        %v542 = vunpack.c.h.bf16 %v520
        %v543 = vunpack.c.l.bf16 %v521
        %v544 = vunpack.c.h.bf16 %v521
        %v545 = vunpack.c.l.bf16 %v522
        %v546 = vunpack.c.h.bf16 %v522
        %v547 = vunpack.c.l.bf16 %v523
        %v548 = vunpack.c.h.bf16 %v523
        %v549 = vunpack.c.l.bf16 %v524
        %v550 = vunpack.c.h.bf16 %v524
        %v551 = vunpack.c.l.bf16 %v525
        %v552 = vunpack.c.h.bf16 %v525
        %v553 = vunpack.c.l.bf16 %v526
        %v554 = vunpack.c.h.bf16 %v526
        %v555 = vunpack.c.l.bf16 %v527
        %v556 = vunpack.c.h.bf16 %v527
        %v557 = vunpack.c.l.bf16 %v528
        %v558 = vunpack.c.h.bf16 %v528
        %v559 = vunpack.c.l.bf16 %v529
        %v560 = vunpack.c.h.bf16 %v529
        %v561 = vunpack.c.l.bf16 %v530
        %v562 = vunpack.c.h.bf16 %v530
        %v563 = vsub.f32 %v531, %v417
        %v564 = vsub.f32 %v532, %v421
        %v565 = vsub.f32 %v533, %v417
        %v566 = vsub.f32 %v534, %v421
        %v567 = vsub.f32 %v535, %v417
        %v568 = vsub.f32 %v536, %v421
        %v569 = vsub.f32 %v537, %v417
        %v570 = vsub.f32 %v538, %v421
        %v571 = vsub.f32 %v539, %v417
        %v572 = vsub.f32 %v540, %v421
        %v573 = vsub.f32 %v541, %v417
        %v574 = vsub.f32 %v542, %v421
        %v575 = vsub.f32 %v543, %v417
        %v576 = vsub.f32 %v544, %v421
        %v577 = vsub.f32 %v545, %v417
        %v578 = vsub.f32 %v546, %v421
        %v579 = vsub.f32 %v547, %v417
        %v580 = vsub.f32 %v548, %v421
        %v581 = vsub.f32 %v549, %v417
        %v582 = vsub.f32 %v550, %v421
        %v583 = vsub.f32 %v551, %v417
        %v584 = vsub.f32 %v552, %v421
        %v585 = vsub.f32 %v553, %v417
        %v586 = vsub.f32 %v554, %v421
        %v587 = vsub.f32 %v555, %v417
        %v588 = vsub.f32 %v556, %v421
        %v589 = vsub.f32 %v557, %v417
        %v590 = vsub.f32 %v558, %v421
        %v591 = vsub.f32 %v559, %v417
        %v592 = vsub.f32 %v560, %v421
        %v593 = vsub.f32 %v561, %v417
        %v594 = vsub.f32 %v562, %v421
        %v595 = vmul.f32 %v563, %v460
        %v596 = vmul.f32 %v564, %v464
        %v597 = vmul.f32 %v565, %v460
        %v598 = vmul.f32 %v566, %v464
        %v599 = vmul.f32 %v567, %v460
        %v600 = vmul.f32 %v568, %v464
        %v601 = vmul.f32 %v569, %v460
        %v602 = vmul.f32 %v570, %v464
        %v603 = vmul.f32 %v571, %v460
        %v604 = vmul.f32 %v572, %v464
        %v605 = vmul.f32 %v573, %v460
        %v606 = vmul.f32 %v574, %v464
        %v607 = vmul.f32 %v575, %v460
        %v608 = vmul.f32 %v576, %v464
        %v609 = vmul.f32 %v577, %v460
        %v610 = vmul.f32 %v578, %v464
        %v611 = vmul.f32 %v579, %v460
        %v612 = vmul.f32 %v580, %v464
        %v613 = vmul.f32 %v581, %v460
        %v614 = vmul.f32 %v582, %v464
        %v615 = vmul.f32 %v583, %v460
        %v616 = vmul.f32 %v584, %v464
        %v617 = vmul.f32 %v585, %v460
        %v618 = vmul.f32 %v586, %v464
        %v619 = vmul.f32 %v587, %v460
        %v620 = vmul.f32 %v588, %v464
        %v621 = vmul.f32 %v589, %v460
        %v622 = vmul.f32 %v590, %v464
        %v623 = vmul.f32 %v591, %v460
        %v624 = vmul.f32 %v592, %v464
        %v625 = vmul.f32 %v593, %v460
        %v626 = vmul.f32 %v594, %v464
        %v627 = vpack.c.bf16 %v597, %v595
        %v628 = vpack.c.bf16 %v598, %v596
        %v629 = vpack.c.bf16 %v601, %v599
        %v630 = vpack.c.bf16 %v602, %v600
        %v631 = vpack.c.bf16 %v605, %v603
        %v632 = vpack.c.bf16 %v606, %v604
        %v633 = vpack.c.bf16 %v609, %v607
        %v634 = vpack.c.bf16 %v610, %v608
        %v635 = vpack.c.bf16 %v613, %v611
        %v636 = vpack.c.bf16 %v614, %v612
        %v637 = vpack.c.bf16 %v617, %v615
        %v638 = vpack.c.bf16 %v618, %v616
        %v639 = vpack.c.bf16 %v621, %v619
        %v640 = vpack.c.bf16 %v622, %v620
        %v641 = vpack.c.bf16 %v625, %v623
        %v642 = vpack.c.bf16 %v626, %v624
        %v675 = vunpack.c.l.b16 %v333
        %v676 = vunpack.c.h.b16 %v333
        %v677 = vunpack.c.l.b16 %v334
        %v678 = vunpack.c.h.b16 %v334
        %v679 = vunpack.c.l.b16 %v335
        %v680 = vunpack.c.h.b16 %v335
        %v681 = vunpack.c.l.b16 %v336
        %v682 = vunpack.c.h.b16 %v336
        %v683 = vunpack.c.l.b16 %v337
        %v684 = vunpack.c.h.b16 %v337
        %v685 = vunpack.c.l.b16 %v338
        %v686 = vunpack.c.h.b16 %v338
        %v687 = vunpack.c.l.b16 %v339
        %v688 = vunpack.c.h.b16 %v339
        %v689 = vunpack.c.l.b16 %v340
        %v690 = vunpack.c.h.b16 %v340
        %v691 = vunpack.c.l.b16 %v341
        %v692 = vunpack.c.h.b16 %v341
        %v693 = vunpack.c.l.b16 %v342
        %v694 = vunpack.c.h.b16 %v342
        %v695 = vunpack.c.l.b16 %v343
        %v696 = vunpack.c.h.b16 %v343
        %v697 = vunpack.c.l.b16 %v344
        %v698 = vunpack.c.h.b16 %v344
        %v699 = vunpack.c.l.b16 %v345
        %v700 = vunpack.c.h.b16 %v345
        %v701 = vunpack.c.l.b16 %v346
        %v702 = vunpack.c.h.b16 %v346
        %v703 = vunpack.c.l.b16 %v347
        %v704 = vunpack.c.h.b16 %v347
        %v705 = vunpack.c.l.b16 %v348
        %v706 = vunpack.c.h.b16 %v348
        %v707 = vunpack.c.l.b16 %v349
        %v708 = vunpack.c.h.b16 %v349
        %v709 = vunpack.c.l.b16 %v350
        %v710 = vunpack.c.h.b16 %v350
        %v711 = vunpack.c.l.b16 %v351
        %v712 = vunpack.c.h.b16 %v351
        %v713 = vunpack.c.l.b16 %v352
        %v714 = vunpack.c.h.b16 %v352
        %v715 = vunpack.c.l.b16 %v353
        %v716 = vunpack.c.h.b16 %v353
        %v717 = vunpack.c.l.b16 %v354
        %v718 = vunpack.c.h.b16 %v354
        %v719 = vunpack.c.l.b16 %v355
        %v720 = vunpack.c.h.b16 %v355
        %v721 = vunpack.c.l.b16 %v356
        %v722 = vunpack.c.h.b16 %v356
        %v723 = vunpack.c.l.b16 %v357
        %v724 = vunpack.c.h.b16 %v357
        %v725 = vunpack.c.l.b16 %v358
        %v726 = vunpack.c.h.b16 %v358
        %v727 = vunpack.c.l.b16 %v359
        %v728 = vunpack.c.h.b16 %v359
        %v729 = vunpack.c.l.b16 %v360
        %v730 = vunpack.c.h.b16 %v360
        %v731 = vunpack.c.l.b16 %v361
        %v732 = vunpack.c.h.b16 %v361
        %v733 = vunpack.c.l.b16 %v362
        %v734 = vunpack.c.h.b16 %v362
        %v735 = vunpack.c.l.b16 %v363
        %v736 = vunpack.c.h.b16 %v363
        %v737 = vunpack.c.l.b16 %v364
        %v738 = vunpack.c.h.b16 %v364
        %v739 = vpack.c.b16 %v677, %v675
        %v740 = vpack.c.b16 %v678, %v676
        %v741 = vpack.c.b16 %v681, %v679
        %v742 = vpack.c.b16 %v682, %v680
        %v743 = vpack.c.b16 %v685, %v683
        %v744 = vpack.c.b16 %v686, %v684
        %v745 = vpack.c.b16 %v689, %v687
        %v746 = vpack.c.b16 %v690, %v688
        %v747 = vpack.c.b16 %v693, %v691
        %v748 = vpack.c.b16 %v694, %v692
        %v749 = vpack.c.b16 %v697, %v695
        %v750 = vpack.c.b16 %v698, %v696
        %v751 = vpack.c.b16 %v701, %v699
        %v752 = vpack.c.b16 %v702, %v700
        %v753 = vpack.c.b16 %v705, %v703
        %v754 = vpack.c.b16 %v706, %v704
        %v755 = vpack.c.b16 %v709, %v707
        %v756 = vpack.c.b16 %v710, %v708
        %v757 = vpack.c.b16 %v713, %v711
        %v758 = vpack.c.b16 %v714, %v712
        %v759 = vpack.c.b16 %v717, %v715
        %v760 = vpack.c.b16 %v718, %v716
        %v761 = vpack.c.b16 %v721, %v719
        %v762 = vpack.c.b16 %v722, %v720
        %v763 = vpack.c.b16 %v725, %v723
        %v764 = vpack.c.b16 %v726, %v724
        %v765 = vpack.c.b16 %v729, %v727
        %v766 = vpack.c.b16 %v730, %v728
        %v767 = vpack.c.b16 %v733, %v731
        %v768 = vpack.c.b16 %v734, %v732
        %v769 = vpack.c.b16 %v737, %v735
        %v770 = vpack.c.b16 %v738, %v736
        %803 = vmatprep.subr.bf16.mxu0 %v740
        %804 = vmatpush1.bf16.xpose.msra.mxu0 %v739
        %805 = vmatprep.subr.bf16.mxu0 %v742
        %806 = vmatpush1.bf16.xpose.msra.mxu0 %v741
        %807 = vmatprep.subr.bf16.mxu0 %v744
        %808 = vmatpush1.bf16.xpose.msra.mxu0 %v743
        %809 = vmatprep.subr.bf16.mxu0 %v746
        %810 = vmatpush1.bf16.xpose.msra.mxu0 %v745
        %811 = vmatprep.subr.bf16.mxu0 %v748
        %812 = vmatpush1.bf16.xpose.msra.mxu0 %v747
        %813 = vmatprep.subr.bf16.mxu0 %v750
        %814 = vmatpush1.bf16.xpose.msra.mxu0 %v749
        %815 = vmatprep.subr.bf16.mxu0 %v752
        %816 = vmatpush1.bf16.xpose.msra.mxu0 %v751
        %817 = vmatprep.subr.bf16.mxu0 %v754
        %818 = vmatpush1.bf16.xpose.msra.mxu0 %v753
        %819 = vmatprep.subr.bf16.mxu0 %v756
        %820 = vmatpush1.bf16.xpose.msra.mxu0 %v755
        %821 = vmatprep.subr.bf16.mxu0 %v758
        %822 = vmatpush1.bf16.xpose.msra.mxu0 %v757
        %823 = vmatprep.subr.bf16.mxu0 %v760
        %824 = vmatpush1.bf16.xpose.msra.mxu0 %v759
        %825 = vmatprep.subr.bf16.mxu0 %v762
        %826 = vmatpush1.bf16.xpose.msra.mxu0 %v761
        %827 = vmatprep.subr.bf16.mxu0 %v764
        %828 = vmatpush1.bf16.xpose.msra.mxu0 %v763
        %829 = vmatprep.subr.bf16.mxu0 %v766
        %830 = vmatpush1.bf16.xpose.msra.mxu0 %v765
        %831 = vmatprep.subr.bf16.mxu0 %v768
        %832 = vmatpush1.bf16.xpose.msra.mxu0 %v767
        %833 = vmatprep.subr.bf16.mxu0 %v770
        %834 = vmatpush1.bf16.xpose.msra.mxu0 %v769
        %835 = vmatprep.mubr.bf16.mxu0 %v500
        %836 = vmatmul.mubr.bf16.gmra.mrb[0].mxu0 %v499
        %v837 = vpop.f32.mrb[0].mxu0
        %v838 = vadd.f32 0.0, %v837
        %v839 = vpop.f32.mrb[0].mxu0
        %v840 = vadd.f32 0.0, %v839
        %v841 = vpop.f32.mrb[0].mxu0
        %v842 = vadd.f32 0.0, %v841
        %v843 = vpop.f32.mrb[0].mxu0
        %v844 = vadd.f32 0.0, %v843
        %845 = vmatprep.mubr.bf16.mxu0 %v502
        %846 = vmatmul.mubr.bf16.gmra.mrb[0].mxu0 %v501
        %v847 = vpop.f32.mrb[0].mxu0
        %v848 = vadd.f32 0.0, %v847
        %v849 = vpop.f32.mrb[0].mxu0
        %v850 = vadd.f32 0.0, %v849
        %v851 = vpop.f32.mrb[0].mxu0
        %v852 = vadd.f32 0.0, %v851
        %v853 = vpop.f32.mrb[0].mxu0
        %v854 = vadd.f32 0.0, %v853
        %855 = vmatprep.mubr.bf16.mxu0 %v504
        %856 = vmatmul.mubr.bf16.gmra.mrb[0].mxu0 %v503
        %v857 = vpop.f32.mrb[0].mxu0
        %v858 = vadd.f32 0.0, %v857
        %v859 = vpop.f32.mrb[0].mxu0
        %v860 = vadd.f32 0.0, %v859
        %v861 = vpop.f32.mrb[0].mxu0
        %v862 = vadd.f32 0.0, %v861
        %v863 = vpop.f32.mrb[0].mxu0
        %v864 = vadd.f32 0.0, %v863
        %865 = vmatprep.mubr.bf16.mxu0 %v506
        %866 = vmatmul.mubr.bf16.gmra.mrb[0].mxu0 %v505
        %v867 = vpop.f32.mrb[0].mxu0
        %v868 = vadd.f32 0.0, %v867
        %v869 = vpop.f32.mrb[0].mxu0
        %v870 = vadd.f32 0.0, %v869
        %v871 = vpop.f32.mrb[0].mxu0
        %v872 = vadd.f32 0.0, %v871
        %v873 = vpop.f32.mrb[0].mxu0
        %v874 = vadd.f32 0.0, %v873
        %875 = vmatprep.mubr.bf16.mxu0 %v508
        %876 = vmatmul.mubr.bf16.gmra.mrb[0].mxu0 %v507
        %v877 = vpop.f32.mrb[0].mxu0
        %v878 = vadd.f32 0.0, %v877
        %v879 = vpop.f32.mrb[0].mxu0
        %v880 = vadd.f32 0.0, %v879
        %v881 = vpop.f32.mrb[0].mxu0
        %v882 = vadd.f32 0.0, %v881
        %v883 = vpop.f32.mrb[0].mxu0
        %v884 = vadd.f32 0.0, %v883
        %885 = vmatprep.mubr.bf16.mxu0 %v510
        %886 = vmatmul.mubr.bf16.gmra.mrb[0].mxu0 %v509
        %v887 = vpop.f32.mrb[0].mxu0
        %v888 = vadd.f32 0.0, %v887
        %v889 = vpop.f32.mrb[0].mxu0
        %v890 = vadd.f32 0.0, %v889
        %v891 = vpop.f32.mrb[0].mxu0
        %v892 = vadd.f32 0.0, %v891
        %v893 = vpop.f32.mrb[0].mxu0
        %v894 = vadd.f32 0.0, %v893
        %895 = vmatprep.mubr.bf16.mxu0 %v512
        %896 = vmatmul.mubr.bf16.gmra.mrb[0].mxu0 %v511
        %v897 = vpop.f32.mrb[0].mxu0
        %v898 = vadd.f32 0.0, %v897
        %v899 = vpop.f32.mrb[0].mxu0
        %v900 = vadd.f32 0.0, %v899
        %v901 = vpop.f32.mrb[0].mxu0
        %v902 = vadd.f32 0.0, %v901
        %v903 = vpop.f32.mrb[0].mxu0
        %v904 = vadd.f32 0.0, %v903
        %905 = vmatprep.mubr.bf16.mxu0 %v514
        %906 = vmatmul.mubr.bf16.gmra.mrb[0].mxu0 %v513
        %v907 = vpop.f32.mrb[0].mxu0
        %v908 = vadd.f32 0.0, %v907
        %v909 = vpop.f32.mrb[0].mxu0
        %v910 = vadd.f32 0.0, %v909
        %v911 = vpop.f32.mrb[0].mxu0
        %v912 = vadd.f32 0.0, %v911
        %v913 = vpop.f32.mrb[0].mxu0
        %v914 = vadd.f32 0.0, %v913
        %915 = vdwg.mxu0
        %916 = vmatprep.subr.bf16.mxu0 %v740
        %917 = vmatpush1.bf16.xpose.msra.mxu0 %v739
        %918 = vmatprep.subr.bf16.mxu0 %v742
        %919 = vmatpush1.bf16.xpose.msra.mxu0 %v741
        %920 = vmatprep.subr.bf16.mxu0 %v744
        %921 = vmatpush1.bf16.xpose.msra.mxu0 %v743
        %922 = vmatprep.subr.bf16.mxu0 %v746
        %923 = vmatpush1.bf16.xpose.msra.mxu0 %v745
        %924 = vmatprep.subr.bf16.mxu0 %v748
        %925 = vmatpush1.bf16.xpose.msra.mxu0 %v747
        %926 = vmatprep.subr.bf16.mxu0 %v750
        %927 = vmatpush1.bf16.xpose.msra.mxu0 %v749
        %928 = vmatprep.subr.bf16.mxu0 %v752
        %929 = vmatpush1.bf16.xpose.msra.mxu0 %v751
        %930 = vmatprep.subr.bf16.mxu0 %v754
        %931 = vmatpush1.bf16.xpose.msra.mxu0 %v753
        %932 = vmatprep.subr.bf16.mxu0 0
        %933 = vmatpush1.bf16.xpose.msra.mxu0 0
        %934 = vmatprep.subr.bf16.mxu0 0
        %935 = vmatpush1.bf16.xpose.msra.mxu0 0
        %936 = vmatprep.subr.bf16.mxu0 0
        %937 = vmatpush1.bf16.xpose.msra.mxu0 0
        %938 = vmatprep.subr.bf16.mxu0 0
        %939 = vmatpush1.bf16.xpose.msra.mxu0 0
        %940 = vmatprep.subr.bf16.mxu0 0
        %941 = vmatpush1.bf16.xpose.msra.mxu0 0
        %942 = vmatprep.subr.bf16.mxu0 0
        %943 = vmatpush1.bf16.xpose.msra.mxu0 0
        %944 = vmatprep.subr.bf16.mxu0 0
        %945 = vmatpush1.bf16.xpose.msra.mxu0 0
        %946 = vmatprep.subr.bf16.mxu0 0
        %947 = vmatpush1.bf16.xpose.msra.mxu0 0
        %948 = vmatprep.mubr.bf16.mxu0 %v628
        %949 = vmatmul.mubr.bf16.gmra.mrb[0].mxu0 %v627
        %v950 = vpop.f32.mrb[0].mxu0
        %v951 = vadd.f32 0.0, %v950
        %v952 = vpop.f32.mrb[0].mxu0
        %v953 = vpop.f32.mrb[0].mxu0
        %v954 = vadd.f32 0.0, %v953
        %v955 = vpop.f32.mrb[0].mxu0
        %956 = vmatprep.mubr.bf16.mxu0 %v630
        %957 = vmatmul.mubr.bf16.gmra.mrb[0].mxu0 %v629
        %v958 = vpop.f32.mrb[0].mxu0
        %v959 = vadd.f32 0.0, %v958
        %v960 = vpop.f32.mrb[0].mxu0
        %v961 = vpop.f32.mrb[0].mxu0
        %v962 = vadd.f32 0.0, %v961
        %v963 = vpop.f32.mrb[0].mxu0
        %964 = vmatprep.mubr.bf16.mxu0 %v632
        %965 = vmatmul.mubr.bf16.gmra.mrb[0].mxu0 %v631
        %v966 = vpop.f32.mrb[0].mxu0
        %v967 = vadd.f32 0.0, %v966
        %v968 = vpop.f32.mrb[0].mxu0
        %v969 = vpop.f32.mrb[0].mxu0
        %v970 = vadd.f32 0.0, %v969
        %v971 = vpop.f32.mrb[0].mxu0
        %972 = vmatprep.mubr.bf16.mxu0 %v634
        %973 = vmatmul.mubr.bf16.gmra.mrb[0].mxu0 %v633
        %v974 = vpop.f32.mrb[0].mxu0
        %v975 = vadd.f32 0.0, %v974
        %v976 = vpop.f32.mrb[0].mxu0
        %v977 = vpop.f32.mrb[0].mxu0
        %v978 = vadd.f32 0.0, %v977
        %v979 = vpop.f32.mrb[0].mxu0
        %980 = vmatprep.mubr.bf16.mxu0 %v636
        %981 = vmatmul.mubr.bf16.gmra.mrb[0].mxu0 %v635
        %v982 = vpop.f32.mrb[0].mxu0
        %v983 = vadd.f32 0.0, %v982
        %v984 = vpop.f32.mrb[0].mxu0
        %v985 = vpop.f32.mrb[0].mxu0
        %v986 = vadd.f32 0.0, %v985
        %v987 = vpop.f32.mrb[0].mxu0
        %988 = vmatprep.mubr.bf16.mxu0 %v638
        %989 = vmatmul.mubr.bf16.gmra.mrb[0].mxu0 %v637
        %v990 = vpop.f32.mrb[0].mxu0
        %v991 = vadd.f32 0.0, %v990
        %v992 = vpop.f32.mrb[0].mxu0
        %v993 = vpop.f32.mrb[0].mxu0
        %v994 = vadd.f32 0.0, %v993
        %v995 = vpop.f32.mrb[0].mxu0
        %996 = vmatprep.mubr.bf16.mxu0 %v640
        %997 = vmatmul.mubr.bf16.gmra.mrb[0].mxu0 %v639
        %v998 = vpop.f32.mrb[0].mxu0
        %v999 = vadd.f32 0.0, %v998
        %v1000 = vpop.f32.mrb[0].mxu0
        %v1001 = vpop.f32.mrb[0].mxu0
        %v1002 = vadd.f32 0.0, %v1001
        %v1003 = vpop.f32.mrb[0].mxu0
        %1004 = vmatprep.mubr.bf16.mxu0 %v642
        %1005 = vmatmul.mubr.bf16.gmra.mrb[0].mxu0 %v641
        %v1006 = vpop.f32.mrb[0].mxu0
        %v1007 = vadd.f32 0.0, %v1006
        %v1008 = vpop.f32.mrb[0].mxu0
        %v1009 = vpop.f32.mrb[0].mxu0
        %v1010 = vadd.f32 0.0, %v1009
        %v1011 = vpop.f32.mrb[0].mxu0
        %1012 = vdwg.mxu0
        %v1013 = vlaneseq
        %v1014 = vand.u32 %v1013, 127
        %vm1015 = vcmp.lt.s32.totalorder %v1014, 10
        %v1016 = vsel %vm1015, %v951, %v838
        %v1017 = vsel %vm1015, %v954, %v842
        %v1018 = vsel %vm1015, %v959, %v848
        %v1019 = vsel %vm1015, %v962, %v852
        %v1020 = vsel %vm1015, %v967, %v858
        %v1021 = vsel %vm1015, %v970, %v862
        %v1022 = vsel %vm1015, %v975, %v868
        %v1023 = vsel %vm1015, %v978, %v872
        %v1024 = vsel %vm1015, %v983, %v878
        %v1025 = vsel %vm1015, %v986, %v882
        %v1026 = vsel %vm1015, %v991, %v888
        %v1027 = vsel %vm1015, %v994, %v892
        %v1028 = vsel %vm1015, %v999, %v898
        %v1029 = vsel %vm1015, %v1002, %v902
        %v1030 = vsel %vm1015, %v1007, %v908
        %v1031 = vsel %vm1015, %v1010, %v912
        %v1032 = vpack.c.bf16 %v1017, %v1016
        %v1033 = vpack.c.bf16 %v844, %v840
        %v1034 = vpack.c.bf16 %v1019, %v1018
        %v1035 = vpack.c.bf16 %v854, %v850
        %v1036 = vpack.c.bf16 %v1021, %v1020
        %v1037 = vpack.c.bf16 %v864, %v860
        %v1038 = vpack.c.bf16 %v1023, %v1022
        %v1039 = vpack.c.bf16 %v874, %v870
        %v1040 = vpack.c.bf16 %v1025, %v1024
        %v1041 = vpack.c.bf16 %v884, %v880
        %v1042 = vpack.c.bf16 %v1027, %v1026
        %v1043 = vpack.c.bf16 %v894, %v890
        %v1044 = vpack.c.bf16 %v1029, %v1028
        %v1045 = vpack.c.bf16 %v904, %v900
        %v1046 = vpack.c.bf16 %v1031, %v1030
        %v1047 = vpack.c.bf16 %v914, %v910
        %1048 = vmatprep.subr.bf16.mxu0 %v740
        %1049 = vmatpush1.bf16.msra.mxu0 %v739
        %1050 = vmatprep.subr.bf16.mxu0 %v742
        %1051 = vmatpush1.bf16.msra.mxu0 %v741
        %1052 = vmatprep.subr.bf16.mxu0 %v744
        %1053 = vmatpush1.bf16.msra.mxu0 %v743
        %1054 = vmatprep.subr.bf16.mxu0 %v746
        %1055 = vmatpush1.bf16.msra.mxu0 %v745
        %1056 = vmatprep.subr.bf16.mxu0 %v748
        %1057 = vmatpush1.bf16.msra.mxu0 %v747
        %1058 = vmatprep.subr.bf16.mxu0 %v750
        %1059 = vmatpush1.bf16.msra.mxu0 %v749
        %1060 = vmatprep.subr.bf16.mxu0 %v752
        %1061 = vmatpush1.bf16.msra.mxu0 %v751
        %1062 = vmatprep.subr.bf16.mxu0 %v754
        %1063 = vmatpush1.bf16.msra.mxu0 %v753
        %1064 = vmatprep.subr.bf16.mxu0 %v756
        %1065 = vmatpush1.bf16.msra.mxu0 %v755
        %1066 = vmatprep.subr.bf16.mxu0 %v758
        %1067 = vmatpush1.bf16.msra.mxu0 %v757
        %1068 = vmatprep.subr.bf16.mxu0 %v760
        %1069 = vmatpush1.bf16.msra.mxu0 %v759
        %1070 = vmatprep.subr.bf16.mxu0 %v762
        %1071 = vmatpush1.bf16.msra.mxu0 %v761
        %1072 = vmatprep.subr.bf16.mxu0 %v764
        %1073 = vmatpush1.bf16.msra.mxu0 %v763
        %1074 = vmatprep.subr.bf16.mxu0 %v766
        %1075 = vmatpush1.bf16.msra.mxu0 %v765
        %1076 = vmatprep.subr.bf16.mxu0 %v768
        %1077 = vmatpush1.bf16.msra.mxu0 %v767
        %1078 = vmatprep.subr.bf16.mxu0 %v770
        %1079 = vmatpush1.bf16.msra.mxu0 %v769
        %1080 = vmatprep.mubr.bf16.mxu0 %v1033
        %1081 = vmatmul.mubr.bf16.gmra.mrb[0].mxu0 %v1032
        %v1082 = vpop.f32.mrb[0].mxu0
        %v1083 = vadd.f32 0.0, %v1082
        %v1084 = vpop.f32.mrb[0].mxu0
        %v1085 = vadd.f32 0.0, %v1084
        %v1086 = vpop.f32.mrb[0].mxu0
        %v1087 = vadd.f32 0.0, %v1086
        %v1088 = vpop.f32.mrb[0].mxu0
        %v1089 = vadd.f32 0.0, %v1088
        %1090 = vmatprep.mubr.bf16.mxu0 %v1035
        %1091 = vmatmul.mubr.bf16.gmra.mrb[0].mxu0 %v1034
        %v1092 = vpop.f32.mrb[0].mxu0
        %v1093 = vadd.f32 0.0, %v1092
        %v1094 = vpop.f32.mrb[0].mxu0
        %v1095 = vadd.f32 0.0, %v1094
        %v1096 = vpop.f32.mrb[0].mxu0
        %v1097 = vadd.f32 0.0, %v1096
        %v1098 = vpop.f32.mrb[0].mxu0
        %v1099 = vadd.f32 0.0, %v1098
        %1100 = vmatprep.mubr.bf16.mxu0 %v1037
        %1101 = vmatmul.mubr.bf16.gmra.mrb[0].mxu0 %v1036
        %v1102 = vpop.f32.mrb[0].mxu0
        %v1103 = vadd.f32 0.0, %v1102
        %v1104 = vpop.f32.mrb[0].mxu0
        %v1105 = vadd.f32 0.0, %v1104
        %v1106 = vpop.f32.mrb[0].mxu0
        %v1107 = vadd.f32 0.0, %v1106
        %v1108 = vpop.f32.mrb[0].mxu0
        %v1109 = vadd.f32 0.0, %v1108
        %1110 = vmatprep.mubr.bf16.mxu0 %v1039
        %1111 = vmatmul.mubr.bf16.gmra.mrb[0].mxu0 %v1038
        %v1112 = vpop.f32.mrb[0].mxu0
        %v1113 = vadd.f32 0.0, %v1112
        %v1114 = vpop.f32.mrb[0].mxu0
        %v1115 = vadd.f32 0.0, %v1114
        %v1116 = vpop.f32.mrb[0].mxu0
        %v1117 = vadd.f32 0.0, %v1116
        %v1118 = vpop.f32.mrb[0].mxu0
        %v1119 = vadd.f32 0.0, %v1118
        %1120 = vmatprep.mubr.bf16.mxu0 %v1041
        %1121 = vmatmul.mubr.bf16.gmra.mrb[0].mxu0 %v1040
        %v1122 = vpop.f32.mrb[0].mxu0
        %v1123 = vadd.f32 0.0, %v1122
        %v1124 = vpop.f32.mrb[0].mxu0
        %v1125 = vadd.f32 0.0, %v1124
        %v1126 = vpop.f32.mrb[0].mxu0
        %v1127 = vadd.f32 0.0, %v1126
        %v1128 = vpop.f32.mrb[0].mxu0
        %v1129 = vadd.f32 0.0, %v1128
        %1130 = vmatprep.mubr.bf16.mxu0 %v1043
        %1131 = vmatmul.mubr.bf16.gmra.mrb[0].mxu0 %v1042
        %v1132 = vpop.f32.mrb[0].mxu0
        %v1133 = vadd.f32 0.0, %v1132
        %v1134 = vpop.f32.mrb[0].mxu0
        %v1135 = vadd.f32 0.0, %v1134
        %v1136 = vpop.f32.mrb[0].mxu0
        %v1137 = vadd.f32 0.0, %v1136
        %v1138 = vpop.f32.mrb[0].mxu0
        %v1139 = vadd.f32 0.0, %v1138
        %1140 = vmatprep.mubr.bf16.mxu0 %v1045
        %1141 = vmatmul.mubr.bf16.gmra.mrb[0].mxu0 %v1044
        %v1142 = vpop.f32.mrb[0].mxu0
        %v1143 = vadd.f32 0.0, %v1142
        %v1144 = vpop.f32.mrb[0].mxu0
        %v1145 = vadd.f32 0.0, %v1144
        %v1146 = vpop.f32.mrb[0].mxu0
        %v1147 = vadd.f32 0.0, %v1146
        %v1148 = vpop.f32.mrb[0].mxu0
        %v1149 = vadd.f32 0.0, %v1148
        %1150 = vmatprep.mubr.bf16.mxu0 %v1047
        %1151 = vmatmul.mubr.bf16.gmra.mrb[0].mxu0 %v1046
        %v1152 = vpop.f32.mrb[0].mxu0
        %v1153 = vadd.f32 0.0, %v1152
        %v1154 = vpop.f32.mrb[0].mxu0
        %v1155 = vadd.f32 0.0, %v1154
        %v1156 = vpop.f32.mrb[0].mxu0
        %v1157 = vadd.f32 0.0, %v1156
        %v1158 = vpop.f32.mrb[0].mxu0
        %v1159 = vadd.f32 0.0, %v1158
        %1160 = vdwg.mxu0
        %v1162 = vlaneseq
        %v1163 = vshrl.u32 %v1162, 7
        %v1164 = vsub.s32 0, %v1163
        %v1165 = vrot.slane %v331, %v1164
        %v1166 = vlaneseq
        %v1167 = vshrl.u32 %v1166, 7
        %v1168 = vsub.s32 1, %v1167
        %v1169 = vrot.slane %v331, %v1168
        %v1172 = vmul.f32 %v1083, %v1165
        %v1173 = vmul.f32 %v1085, %v1169
        %v1174 = vmul.f32 %v1087, %v1165
        %v1175 = vmul.f32 %v1089, %v1169
        %v1176 = vmul.f32 %v1093, %v1165
        %v1177 = vmul.f32 %v1095, %v1169
        %v1178 = vmul.f32 %v1097, %v1165
        %v1179 = vmul.f32 %v1099, %v1169
        %v1180 = vmul.f32 %v1103, %v1165
        %v1181 = vmul.f32 %v1105, %v1169
        %v1182 = vmul.f32 %v1107, %v1165
        %v1183 = vmul.f32 %v1109, %v1169
        %v1184 = vmul.f32 %v1113, %v1165
        %v1185 = vmul.f32 %v1115, %v1169
        %v1186 = vmul.f32 %v1117, %v1165
        %v1187 = vmul.f32 %v1119, %v1169
        %v1188 = vmul.f32 %v1123, %v1165
        %v1189 = vmul.f32 %v1125, %v1169
        %v1190 = vmul.f32 %v1127, %v1165
        %v1191 = vmul.f32 %v1129, %v1169
        %v1192 = vmul.f32 %v1133, %v1165
        %v1193 = vmul.f32 %v1135, %v1169
        %v1194 = vmul.f32 %v1137, %v1165
        %v1195 = vmul.f32 %v1139, %v1169
        %v1196 = vmul.f32 %v1143, %v1165
        %v1197 = vmul.f32 %v1145, %v1169
        %v1198 = vmul.f32 %v1147, %v1165
        %v1199 = vmul.f32 %v1149, %v1169
        %v1200 = vmul.f32 %v1153, %v1165
        %v1201 = vmul.f32 %v1155, %v1169
        %v1202 = vmul.f32 %v1157, %v1165
        %v1203 = vmul.f32 %v1159, %v1169
        %v1204 = vadd.f32 %v1172, %v417
        %v1205 = vadd.f32 %v1173, %v421
        %v1206 = vadd.f32 %v1174, %v417
        %v1207 = vadd.f32 %v1175, %v421
        %v1208 = vadd.f32 %v1176, %v417
        %v1209 = vadd.f32 %v1177, %v421
        %v1210 = vadd.f32 %v1178, %v417
        %v1211 = vadd.f32 %v1179, %v421
        %v1212 = vadd.f32 %v1180, %v417
        %v1213 = vadd.f32 %v1181, %v421
        %v1214 = vadd.f32 %v1182, %v417
        %v1215 = vadd.f32 %v1183, %v421
        %v1216 = vadd.f32 %v1184, %v417
        %v1217 = vadd.f32 %v1185, %v421
        %v1218 = vadd.f32 %v1186, %v417
        %v1219 = vadd.f32 %v1187, %v421
        %v1220 = vadd.f32 %v1188, %v417
        %v1221 = vadd.f32 %v1189, %v421
        %v1222 = vadd.f32 %v1190, %v417
        %v1223 = vadd.f32 %v1191, %v421
        %v1224 = vadd.f32 %v1192, %v417
        %v1225 = vadd.f32 %v1193, %v421
        %v1226 = vadd.f32 %v1194, %v417
        %v1227 = vadd.f32 %v1195, %v421
        %v1228 = vadd.f32 %v1196, %v417
        %v1229 = vadd.f32 %v1197, %v421
        %v1230 = vadd.f32 %v1198, %v417
        %v1231 = vadd.f32 %v1199, %v421
        %v1232 = vadd.f32 %v1200, %v417
        %v1233 = vadd.f32 %v1201, %v421
        %v1234 = vadd.f32 %v1202, %v417
        %v1235 = vadd.f32 %v1203, %v421
        %1236 = vst [vmem:[%s325] sm:$0xff] %v1204
        %1237 = vst [vmem:[%s325 + $0x8] sm:$0xff] %v1205
        %1238 = vst [vmem:[%s325 + $0x10] sm:$0xff] %v1206
        %1239 = vst [vmem:[%s325 + $0x18] sm:$0xff] %v1207
        %1240 = vst [vmem:[%s325 + $0x20] sm:$0xff] %v1208
        %1241 = vst [vmem:[%s325 + $0x28] sm:$0xff] %v1209
        %1242 = vst [vmem:[%s325 + $0x30] sm:$0xff] %v1210
        %1243 = vst [vmem:[%s325 + $0x38] sm:$0xff] %v1211
        %1244 = vst [vmem:[%s325 + $0x40] sm:$0xff] %v1212
        %1245 = vst [vmem:[%s325 + $0x48] sm:$0xff] %v1213
        %1246 = vst [vmem:[%s325 + $0x50] sm:$0xff] %v1214
        %1247 = vst [vmem:[%s325 + $0x58] sm:$0xff] %v1215
        %1248 = vst [vmem:[%s325 + $0x60] sm:$0xff] %v1216
        %1249 = vst [vmem:[%s325 + $0x68] sm:$0xff] %v1217
        %1250 = vst [vmem:[%s325 + $0x70] sm:$0xff] %v1218
        %1251 = vst [vmem:[%s325 + $0x78] sm:$0xff] %v1219
        %1252 = vst [vmem:[%s325 + $0x80] sm:$0xff] %v1220
        %1253 = vst [vmem:[%s325 + $0x88] sm:$0xff] %v1221
        %1254 = vst [vmem:[%s325 + $0x90] sm:$0xff] %v1222
        %1255 = vst [vmem:[%s325 + $0x98] sm:$0xff] %v1223
        %1256 = vst [vmem:[%s325 + $0xa0] sm:$0xff] %v1224
        %1257 = vst [vmem:[%s325 + $0xa8] sm:$0xff] %v1225
        %1258 = vst [vmem:[%s325 + $0xb0] sm:$0xff] %v1226
        %1259 = vst [vmem:[%s325 + $0xb8] sm:$0xff] %v1227
        %1260 = vst [vmem:[%s325 + $0xc0] sm:$0xff] %v1228
        %1261 = vst [vmem:[%s325 + $0xc8] sm:$0xff] %v1229
        %1262 = vst [vmem:[%s325 + $0xd0] sm:$0xff] %v1230
        %1263 = vst [vmem:[%s325 + $0xd8] sm:$0xff] %v1231
        %1264 = vst [vmem:[%s325 + $0xe0] sm:$0xff] %v1232
        %1265 = vst [vmem:[%s325 + $0xe8] sm:$0xff] %v1233
        %1266 = vst [vmem:[%s325 + $0xf0] sm:$0xff] %v1234
        %1267 = vst [vmem:[%s325 + $0xf8] sm:$0xff] %v1235
        %s1268 = sand.u32 %s170, 1
        %s1269 = scalar_lea.sflag [#allocation4], %s1268
        %s1270 = sand.u32 %s170, 1
        %s1271 = smul.addr %s1270, 256
        %s1272 = scalar_lea.vmem [#allocation8], %s1271
        // Predicated region
        $region57: #{tpu_custom_call.1} parent=43 // pred_check
          %p1273 = pneg %p180
        $region58: #{tpu_custom_call.1} parent=43 // pred_check_branch
          %1275 = sbr.rel (%p1273) target = $region60
        $region59: #{tpu_custom_call.1} parent=43 // pred_region
          %s1276 = smul.u32 16, %s26
          %s1278 = ssub.s32 4096, 4096
          %1279 = vsyncadd %s1269, %s1278
          %s1280 = smul.addr %s1276, 2
          %s1281 = smul.addr %s1280, 128
          %s1282 = scalar_lea.hbm %s6, %s1281
          %s1283 = sshll.u32 %s1272, 4
          %s1284 = int_to_ptr.vmem [resolvable:$true] %s1283
          %1289 = dma.vmem_to_hbm [thread:$0]  %s1284, 4096, %s1282, %s1269, 256, 256, 16
        $region60: #{tpu_custom_call.1} parent=43 // pred_fallthru
          _
      $region44: #{tpu_custom_call.1} parent=5 // pred_fallthru
        _
      %p1290 = scmp.le.s32.totalorder 2, %s21
      // Predicated region
      $region61: #{tpu_custom_call.1} parent=5 // pred_check
        %p1291 = pneg %p1290
      $region62: #{tpu_custom_call.1} parent=5 // pred_check_branch
        %1293 = sbr.rel (%p1291) target = $region64
      $region63: #{tpu_custom_call.1} parent=5 // pred_region
        %s1294 = ssub.s32 %s21, 2
        // Predicated region
        $region65: #{tpu_custom_call.1} parent=63 // pred_check
          %p1295 = pneg %p186
        $region66: #{tpu_custom_call.1} parent=63 // pred_check_branch
          %1297 = sbr.rel (%p1295) target = $region68
        $region67: #{tpu_custom_call.1} parent=63 // pred_region
          %s1298 = sand.u32 %s171, 1
          %s1299 = scalar_lea.sflag [#allocation4], %s1298
          %s1300 = sand.u32 %s171, 1
          %s1301 = smul.addr %s1300, 256
          %s1302 = scalar_lea.vmem [#allocation8], %s1301
          %1303 = dma.done %s1299, 4096
        $region68: #{tpu_custom_call.1} parent=63 // pred_fallthru
          _
      $region64: #{tpu_custom_call.1} parent=5 // pred_fallthru
        _
    $region6: #{tpu_custom_call.1} parent=1 // loop_footer
      %s25 = sadd.s32 1, %s21
    $region7: #{tpu_custom_call.1} parent=1 // loop_footer_branch
      %20 = sbr.rel target = $region3
    $region8: #{tpu_custom_call.1} parent=1 // loop_exit
      _
    %1304 = vsyncpa [#allocation3], 1
    %s1305 = scalar_lea.sflag [#allocation3], 1
    %1306 = vsyncpa %s1305, 1
    %1307 = vsyncpa [#allocation6], 1
    %s1308 = scalar_lea.sflag [#allocation6], 1
    %1309 = vsyncpa %s1308, 1
    %1310 = vsyncpa [#allocation4], 1
    %s1311 = scalar_lea.sflag [#allocation4], 1
    %1312 = vsyncpa %s1311, 1

</llo_original>
